<compile_context>
chip_gen: v7x
topology: tpu7x:2x2x1
jax: 0.10.0
libtpu: 0.0.40
codegen_flags: <defaults>
</compile_context>

<pallas_src>
import math
import jax
import jax.numpy as jnp
from jax.experimental import pallas as pl
from jax.experimental.pallas import tpu as pltpu

# ---- model dims (small, consistent with the module) ----
B, S, D, H = 2, 8, 32, 4          # batch, seq, d_model, num_heads
DK = D // H                        # per-head dim
DFF = 64                           # feed-forward hidden dim
BS = B * S                         # rows of the fused (batch*seq, D) slab


def encoder_layer_kernel(x_ref, mask_ref, wqkv_ref, bqkv_ref, wo_ref, bo_ref,
                         w1_ref, b1_ref, w2_ref, b2_ref, o_ref):
    # (B, S, D) -> (B*S, D): leading-dim merge (sublane-aligned, no relayout)
    x = x_ref[...].reshape(BS, D)
    mask = mask_ref[...]                   # (B, S, S), 1 = attend / 0 = masked

    # --- fused Q/K/V projection: one MXU push with N = 3D ---
    qkv = (jnp.dot(x, wqkv_ref[...], preferred_element_type=jnp.float32)
           + bqkv_ref[...])
    q = qkv[:, 0:D] * (1.0 / math.sqrt(DK))   # fold the 1/sqrt(dk) scale once
    k = qkv[:, D:2 * D]
    v = qkv[:, 2 * D:3 * D]

    wo = wo_ref[...]                           # (D, D)
    acc = jnp.zeros((BS, D), jnp.float32)      # fused head-concat + Wo accum

    # Static loop over heads (H small & fixed); heads are static lane slices.
    for h in range(H):
        lo, hi = h * DK, (h + 1) * DK
        qh = q[:, lo:hi].reshape(B, S, DK)     # (B, S, DK)
        kh = k[:, lo:hi].reshape(B, S, DK)
        vh = v[:, lo:hi].reshape(B, S, DK)

        # scores (B, S, S): batched over B, contract DK (no transpose made)
        s = jax.lax.dot_general(qh, kh, (((2,), (2,)), ((0,), (0,))),
                                preferred_element_type=jnp.float32)
        s = jnp.where(mask == 0.0, -1e9, s)

        # numerically-stable softmax along keys (exact reciprocal)
        m = jnp.max(s, axis=-1, keepdims=True)
        p = jnp.exp(s - m)
        attn = p * pl.reciprocal(jnp.sum(p, axis=-1, keepdims=True))

        # (B, S, DK) = attn @ V_h, batched over B
        oh = jax.lax.dot_general(attn, vh, (((2,), (1,)), ((0,), (0,))),
                                 preferred_element_type=jnp.float32)

        # fold the head-concat straight into the output projection:
        # concat(heads) @ Wo == sum_h head_h @ Wo[h*DK:(h+1)*DK, :]
        acc = acc + jnp.dot(oh.reshape(BS, DK), wo[lo:hi, :],
                            preferred_element_type=jnp.float32)

    attn_out = acc + bo_ref[...]

    # --- position-wise feed-forward ---
    h1 = jnp.maximum(
        jnp.dot(attn_out, w1_ref[...], preferred_element_type=jnp.float32)
        + b1_ref[...], 0.0)
    y = (jnp.dot(h1, w2_ref[...], preferred_element_type=jnp.float32)
         + b2_ref[...])

    o_ref[...] = y.reshape(B, S, D).astype(o_ref.dtype)


def pack_params(params):
    """One-time prep: fuse only the Q/K/V projection (weight + bias); keep
    everything else unpacked so all in-kernel slices stay trivially aligned."""
    (wq, bq, wk, bk, wv, bv, wo, bo, w1, b1, w2, b2) = params
    w_qkv = jnp.concatenate([wq, wk, wv], axis=1)      # (D, 3D)
    b_qkv = jnp.concatenate([bq, bk, bv], axis=1)      # (1, 3D)
    return (w_qkv, b_qkv, wo, bo, w1, b1, w2, b2)


def encoder_layer(x, mask, packed):
    (w_qkv, b_qkv, wo, bo, w1, b1, w2, b2) = packed

    def full(shape):
        return pl.BlockSpec(shape, lambda i, _n=len(shape): (0,) * _n)

    return pl.pallas_call(
        encoder_layer_kernel,
        out_shape=jax.ShapeDtypeStruct((B, S, D), x.dtype),
        grid_spec=pltpu.PrefetchScalarGridSpec(
            num_scalar_prefetch=0,
            grid=(1,),                      # whole problem in one step
            in_specs=[
                full((B, S, D)),            # x
                full((B, S, S)),            # 0/1 attention mask
                full((D, 3 * D)),           # fused QKV weight
                full((1, 3 * D)),           # fused QKV bias
                full((D, D)),               # Wo
                full((1, D)),               # b_o
                full((D, DFF)),             # W_ffn1
                full((1, DFF)),             # b_ffn1
                full((DFF, D)),             # W_ffn2
                full((1, D)),               # b_ffn2
            ],
            out_specs=full((B, S, D)),
        ),
        compiler_params=pltpu.CompilerParams(
            dimension_semantics=("arbitrary",)),
    )(x, mask, w_qkv, b_qkv, wo, bo, w1, b1, w2, b2)


def reference(x, mask, params):
    """Plain-JAX reference of the same forward pass (unpacked params)."""
    (wq, bq, wk, bk, wv, bv, wo, bo, w1, b1, w2, b2) = params
    q = x @ wq + bq
    k = x @ wk + bk
    v = x @ wv + bv

    def split(t):  # (B,S,D) -> (B,H,S,DK)
        return t.reshape(B, S, H, DK).transpose(0, 2, 1, 3)

    qh, kh, vh = split(q), split(k), split(v)
    scores = jnp.einsum("bhqd,bhkd->bhqk", qh, kh) / math.sqrt(DK)
    scores = jnp.where(mask[:, None, :, :] == 0.0, -1e9, scores)
    attn = jax.nn.softmax(scores, axis=-1)
    out = jnp.einsum("bhqk,bhkd->bhqd", attn, vh)
    out = out.transpose(0, 2, 1, 3).reshape(B, S, D)
    out = out @ wo + bo
    h1 = jnp.maximum(out @ w1 + b1, 0.0)
    return h1 @ w2 + b2


def init_params(key):
    ks = jax.random.split(key, 6)
    scl_d = 1.0 / math.sqrt(D)
    scl_f = 1.0 / math.sqrt(DFF)
    wq = jax.random.normal(ks[0], (D, D), jnp.float32) * scl_d
    wk = jax.random.normal(ks[1], (D, D), jnp.float32) * scl_d
    wv = jax.random.normal(ks[2], (D, D), jnp.float32) * scl_d
    wo = jax.random.normal(ks[3], (D, D), jnp.float32) * scl_d
    w1 = jax.random.normal(ks[4], (D, DFF), jnp.float32) * scl_d
    w2 = jax.random.normal(ks[5], (DFF, D), jnp.float32) * scl_f
    # biases kept 2-D (1, out) so broadcast-add is a plain lane-aligned op
    bq = jnp.full((1, D), 0.01, jnp.float32)
    bk = jnp.full((1, D), -0.01, jnp.float32)
    bv = jnp.full((1, D), 0.02, jnp.float32)
    bo = jnp.full((1, D), 0.0, jnp.float32)
    b1 = jnp.full((1, DFF), 0.03, jnp.float32)
    b2 = jnp.full((1, D), -0.02, jnp.float32)
    return (wq, bq, wk, bk, wv, bv, wo, bo, w1, b1, w2, b2)


if __name__ == "__main__":
    key = jax.random.PRNGKey(0)
    kx, kp = jax.random.split(key)
    x = jax.random.normal(kx, (B, S, D), jnp.float32)
    # simple causal-style mask (1 = attend, 0 = masked), shape (B, S, S)
    mask = jnp.tril(jnp.ones((S, S), jnp.float32))[None].repeat(B, axis=0)
    params = init_params(kp)
    packed = pack_params(params)          # one-time prep, hoisted out of calls

    out = encoder_layer(x, mask, packed)
    out = jax.block_until_ready(out)

    ref = reference(x, mask, params)
    assert out.shape == (B, S, D)
    assert jnp.allclose(out, ref, atol=1e-4, rtol=1e-4), "mismatch vs reference"
    print("KERNEL_OK")
</pallas_src>

<mosaic_0001>
module attributes {stable_mosaic.version = 11 : i64} {
  func.func @encoder_layer_kernel(%arg0: i32, %arg1: memref<2x8x32xf32, #tpu.memory_space<vmem>>, %arg2: memref<2x8x8xf32, #tpu.memory_space<vmem>>, %arg3: memref<32x96xf32, #tpu.memory_space<vmem>>, %arg4: memref<1x96xf32, #tpu.memory_space<vmem>>, %arg5: memref<32x32xf32, #tpu.memory_space<vmem>>, %arg6: memref<1x32xf32, #tpu.memory_space<vmem>>, %arg7: memref<32x64xf32, #tpu.memory_space<vmem>>, %arg8: memref<1x64xf32, #tpu.memory_space<vmem>>, %arg9: memref<64x32xf32, #tpu.memory_space<vmem>>, %arg10: memref<1x32xf32, #tpu.memory_space<vmem>>, %arg11: memref<2x8x32xf32, #tpu.memory_space<vmem>>) attributes {dimension_semantics = [#tpu.dimension_semantics<arbitrary>], iteration_bounds = array<i64: 1>, scalar_prefetch = 0 : i64, scratch_operands = 0 : i64, tpu.core_type = #tpu.core_type<tc>, window_params = [{pipeline_mode = #tpu.pipeline_mode<synchronous>, transform_indices = @transform_0, window_bounds = array<i64: 2, 8, 32>}, {pipeline_mode = #tpu.pipeline_mode<synchronous>, transform_indices = @transform_1, window_bounds = array<i64: 2, 8, 8>}, {pipeline_mode = #tpu.pipeline_mode<synchronous>, transform_indices = @transform_2, window_bounds = array<i64: 32, 96>}, {pipeline_mode = #tpu.pipeline_mode<synchronous>, transform_indices = @transform_3, window_bounds = array<i64: 1, 96>}, {pipeline_mode = #tpu.pipeline_mode<synchronous>, transform_indices = @transform_4, window_bounds = array<i64: 32, 32>}, {pipeline_mode = #tpu.pipeline_mode<synchronous>, transform_indices = @transform_5, window_bounds = array<i64: 1, 32>}, {pipeline_mode = #tpu.pipeline_mode<synchronous>, transform_indices = @transform_6, window_bounds = array<i64: 32, 64>}, {pipeline_mode = #tpu.pipeline_mode<synchronous>, transform_indices = @transform_7, window_bounds = array<i64: 1, 64>}, {pipeline_mode = #tpu.pipeline_mode<synchronous>, transform_indices = @transform_8, window_bounds = array<i64: 64, 32>}, {pipeline_mode = #tpu.pipeline_mode<synchronous>, transform_indices = @transform_9, window_bounds = array<i64: 1, 32>}, {pipeline_mode = #tpu.pipeline_mode<synchronous>, transform_indices = @transform_10, window_bounds = array<i64: 2, 8, 32>}]} {
    %c0 = arith.constant 0 : index
    %c0_0 = arith.constant 0 : index
    %c0_1 = arith.constant 0 : index
    %0 = vector.load %arg1[%c0, %c0_0, %c0_1] : memref<2x8x32xf32, #tpu.memory_space<vmem>>, vector<2x8x32xf32>
    %1 = vector.shape_cast %0 : vector<2x8x32xf32> to vector<16x32xf32>
    %c0_2 = arith.constant 0 : index
    %c0_3 = arith.constant 0 : index
    %c0_4 = arith.constant 0 : index
    %2 = vector.load %arg2[%c0_2, %c0_3, %c0_4] : memref<2x8x8xf32, #tpu.memory_space<vmem>>, vector<2x8x8xf32>
    %c0_5 = arith.constant 0 : index
    %c0_6 = arith.constant 0 : index
    %3 = vector.load %arg3[%c0_5, %c0_6] : memref<32x96xf32, #tpu.memory_space<vmem>>, vector<32x96xf32>
    %cst = arith.constant dense<0.000000e+00> : vector<16x96xf32>
    %4 = tpu.matmul %1, %3, %cst {dimension_numbers = #tpu.dot_dimension_numbers<[1], [0], [0], [1], [0, 0, 1, 1], [], []>} : vector<16x32xf32>, vector<32x96xf32>, vector<16x96xf32> -> vector<16x96xf32>
    %c0_7 = arith.constant 0 : index
    %c0_8 = arith.constant 0 : index
    %5 = vector.load %arg4[%c0_7, %c0_8] : memref<1x96xf32, #tpu.memory_space<vmem>>, vector<1x96xf32>
    %6 = vector.broadcast %5 : vector<1x96xf32> to vector<16x96xf32>
    %7 = arith.addf %4, %6 : vector<16x96xf32>
    %8 = vector.extract_strided_slice %7 {offsets = [0, 0], sizes = [16, 32], strides = [1, 1]} : vector<16x96xf32> to vector<16x32xf32>
    %cst_9 = arith.constant 0.353553385 : f32
    %9 = vector.broadcast %cst_9 : f32 to vector<16x32xf32>
    %10 = arith.mulf %8, %9 : vector<16x32xf32>
    %11 = vector.extract_strided_slice %7 {offsets = [0, 32], sizes = [16, 32], strides = [1, 1]} : vector<16x96xf32> to vector<16x32xf32>
    %12 = vector.extract_strided_slice %7 {offsets = [0, 64], sizes = [16, 32], strides = [1, 1]} : vector<16x96xf32> to vector<16x32xf32>
    %c0_10 = arith.constant 0 : index
    %c0_11 = arith.constant 0 : index
    %13 = vector.load %arg5[%c0_10, %c0_11] : memref<32x32xf32, #tpu.memory_space<vmem>>, vector<32x32xf32>
    %cst_12 = arith.constant 0.000000e+00 : f32
    %14 = vector.broadcast %cst_12 : f32 to vector<16x32xf32>
    %15 = vector.extract_strided_slice %10 {offsets = [0, 0], sizes = [16, 8], strides = [1, 1]} : vector<16x32xf32> to vector<16x8xf32>
    %16 = vector.shape_cast %15 : vector<16x8xf32> to vector<2x8x8xf32>
    %17 = vector.extract_strided_slice %11 {offsets = [0, 0], sizes = [16, 8], strides = [1, 1]} : vector<16x32xf32> to vector<16x8xf32>
    %18 = vector.shape_cast %17 : vector<16x8xf32> to vector<2x8x8xf32>
    %19 = vector.extract_strided_slice %12 {offsets = [0, 0], sizes = [16, 8], strides = [1, 1]} : vector<16x32xf32> to vector<16x8xf32>
    %20 = vector.shape_cast %19 : vector<16x8xf32> to vector<2x8x8xf32>
    %cst_13 = arith.constant dense<0.000000e+00> : vector<2x8x8xf32>
    %21 = tpu.matmul %16, %18, %cst_13 {dimension_numbers = #tpu.dot_dimension_numbers<[2], [2], [1], [1], [0, 0, 0, 1, 1, 1], [0], [0]>} : vector<2x8x8xf32>, vector<2x8x8xf32>, vector<2x8x8xf32> -> vector<2x8x8xf32>
    %cst_14 = arith.constant 0.000000e+00 : f32
    %22 = vector.broadcast %cst_14 : f32 to vector<2x8x8xf32>
    %23 = arith.cmpf oeq, %2, %22 : vector<2x8x8xf32>
    %cst_15 = arith.constant -1.000000e+09 : f32
    %24 = vector.broadcast %cst_15 : f32 to vector<2x8x8xf32>
    %25 = arith.select %23, %24, %21 : vector<2x8x8xi1>, vector<2x8x8xf32>
    %cst_16 = arith.constant dense<0xFF800000> : vector<2x8xf32>
    %26 = vector.multi_reduction <maximumf>, %25, %cst_16 [2] : vector<2x8x8xf32> to vector<2x8xf32>
    %27 = vector.shape_cast %26 : vector<2x8xf32> to vector<2x8x1xf32>
    %28 = vector.broadcast %27 : vector<2x8x1xf32> to vector<2x8x8xf32>
    %29 = arith.subf %25, %28 : vector<2x8x8xf32>
    %30 = math.exp %29 : vector<2x8x8xf32>
    %cst_17 = arith.constant dense<0.000000e+00> : vector<2x8xf32>
    %31 = vector.multi_reduction <add>, %30, %cst_17 [2] : vector<2x8x8xf32> to vector<2x8xf32>
    %32 = vector.shape_cast %31 : vector<2x8xf32> to vector<2x8x1xf32>
    %33 = tpu.reciprocal %32 : vector<2x8x1xf32> -> vector<2x8x1xf32>
    %34 = vector.broadcast %33 : vector<2x8x1xf32> to vector<2x8x8xf32>
    %35 = arith.mulf %30, %34 : vector<2x8x8xf32>
    %cst_18 = arith.constant dense<0.000000e+00> : vector<2x8x8xf32>
    %36 = tpu.matmul %35, %20, %cst_18 {dimension_numbers = #tpu.dot_dimension_numbers<[2], [1], [1], [2], [0, 0, 0, 1, 1, 2], [0], [0]>} : vector<2x8x8xf32>, vector<2x8x8xf32>, vector<2x8x8xf32> -> vector<2x8x8xf32>
    %37 = vector.shape_cast %36 : vector<2x8x8xf32> to vector<16x8xf32>
    %38 = vector.extract_strided_slice %13 {offsets = [0, 0], sizes = [8, 32], strides = [1, 1]} : vector<32x32xf32> to vector<8x32xf32>
    %cst_19 = arith.constant dense<0.000000e+00> : vector<16x32xf32>
    %39 = tpu.matmul %37, %38, %cst_19 {dimension_numbers = #tpu.dot_dimension_numbers<[1], [0], [0], [1], [0, 0, 1, 1], [], []>} : vector<16x8xf32>, vector<8x32xf32>, vector<16x32xf32> -> vector<16x32xf32>
    %40 = arith.addf %14, %39 : vector<16x32xf32>
    %41 = vector.extract_strided_slice %10 {offsets = [0, 8], sizes = [16, 8], strides = [1, 1]} : vector<16x32xf32> to vector<16x8xf32>
    %42 = vector.shape_cast %41 : vector<16x8xf32> to vector<2x8x8xf32>
    %43 = vector.extract_strided_slice %11 {offsets = [0, 8], sizes = [16, 8], strides = [1, 1]} : vector<16x32xf32> to vector<16x8xf32>
    %44 = vector.shape_cast %43 : vector<16x8xf32> to vector<2x8x8xf32>
    %45 = vector.extract_strided_slice %12 {offsets = [0, 8], sizes = [16, 8], strides = [1, 1]} : vector<16x32xf32> to vector<16x8xf32>
    %46 = vector.shape_cast %45 : vector<16x8xf32> to vector<2x8x8xf32>
    %cst_20 = arith.constant dense<0.000000e+00> : vector<2x8x8xf32>
    %47 = tpu.matmul %42, %44, %cst_20 {dimension_numbers = #tpu.dot_dimension_numbers<[2], [2], [1], [1], [0, 0, 0, 1, 1, 1], [0], [0]>} : vector<2x8x8xf32>, vector<2x8x8xf32>, vector<2x8x8xf32> -> vector<2x8x8xf32>
    %cst_21 = arith.constant 0.000000e+00 : f32
    %48 = vector.broadcast %cst_21 : f32 to vector<2x8x8xf32>
    %49 = arith.cmpf oeq, %2, %48 : vector<2x8x8xf32>
    %cst_22 = arith.constant -1.000000e+09 : f32
    %50 = vector.broadcast %cst_22 : f32 to vector<2x8x8xf32>
    %51 = arith.select %49, %50, %47 : vector<2x8x8xi1>, vector<2x8x8xf32>
    %cst_23 = arith.constant dense<0xFF800000> : vector<2x8xf32>
    %52 = vector.multi_reduction <maximumf>, %51, %cst_23 [2] : vector<2x8x8xf32> to vector<2x8xf32>
    %53 = vector.shape_cast %52 : vector<2x8xf32> to vector<2x8x1xf32>
    %54 = vector.broadcast %53 : vector<2x8x1xf32> to vector<2x8x8xf32>
    %55 = arith.subf %51, %54 : vector<2x8x8xf32>
    %56 = math.exp %55 : vector<2x8x8xf32>
    %cst_24 = arith.constant dense<0.000000e+00> : vector<2x8xf32>
    %57 = vector.multi_reduction <add>, %56, %cst_24 [2] : vector<2x8x8xf32> to vector<2x8xf32>
    %58 = vector.shape_cast %57 : vector<2x8xf32> to vector<2x8x1xf32>
    %59 = tpu.reciprocal %58 : vector<2x8x1xf32> -> vector<2x8x1xf32>
    %60 = vector.broadcast %59 : vector<2x8x1xf32> to vector<2x8x8xf32>
    %61 = arith.mulf %56, %60 : vector<2x8x8xf32>
    %cst_25 = arith.constant dense<0.000000e+00> : vector<2x8x8xf32>
    %62 = tpu.matmul %61, %46, %cst_25 {dimension_numbers = #tpu.dot_dimension_numbers<[2], [1], [1], [2], [0, 0, 0, 1, 1, 2], [0], [0]>} : vector<2x8x8xf32>, vector<2x8x8xf32>, vector<2x8x8xf32> -> vector<2x8x8xf32>
    %63 = vector.shape_cast %62 : vector<2x8x8xf32> to vector<16x8xf32>
    %64 = vector.extract_strided_slice %13 {offsets = [8, 0], sizes = [8, 32], strides = [1, 1]} : vector<32x32xf32> to vector<8x32xf32>
    %cst_26 = arith.constant dense<0.000000e+00> : vector<16x32xf32>
    %65 = tpu.matmul %63, %64, %cst_26 {dimension_numbers = #tpu.dot_dimension_numbers<[1], [0], [0], [1], [0, 0, 1, 1], [], []>} : vector<16x8xf32>, vector<8x32xf32>, vector<16x32xf32> -> vector<16x32xf32>
    %66 = arith.addf %40, %65 : vector<16x32xf32>
    %67 = vector.extract_strided_slice %10 {offsets = [0, 16], sizes = [16, 8], strides = [1, 1]} : vector<16x32xf32> to vector<16x8xf32>
    %68 = vector.shape_cast %67 : vector<16x8xf32> to vector<2x8x8xf32>
    %69 = vector.extract_strided_slice %11 {offsets = [0, 16], sizes = [16, 8], strides = [1, 1]} : vector<16x32xf32> to vector<16x8xf32>
    %70 = vector.shape_cast %69 : vector<16x8xf32> to vector<2x8x8xf32>
    %71 = vector.extract_strided_slice %12 {offsets = [0, 16], sizes = [16, 8], strides = [1, 1]} : vector<16x32xf32> to vector<16x8xf32>
    %72 = vector.shape_cast %71 : vector<16x8xf32> to vector<2x8x8xf32>
    %cst_27 = arith.constant dense<0.000000e+00> : vector<2x8x8xf32>
    %73 = tpu.matmul %68, %70, %cst_27 {dimension_numbers = #tpu.dot_dimension_numbers<[2], [2], [1], [1], [0, 0, 0, 1, 1, 1], [0], [0]>} : vector<2x8x8xf32>, vector<2x8x8xf32>, vector<2x8x8xf32> -> vector<2x8x8xf32>
    %cst_28 = arith.constant 0.000000e+00 : f32
    %74 = vector.broadcast %cst_28 : f32 to vector<2x8x8xf32>
    %75 = arith.cmpf oeq, %2, %74 : vector<2x8x8xf32>
    %cst_29 = arith.constant -1.000000e+09 : f32
    %76 = vector.broadcast %cst_29 : f32 to vector<2x8x8xf32>
    %77 = arith.select %75, %76, %73 : vector<2x8x8xi1>, vector<2x8x8xf32>
    %cst_30 = arith.constant dense<0xFF800000> : vector<2x8xf32>
    %78 = vector.multi_reduction <maximumf>, %77, %cst_30 [2] : vector<2x8x8xf32> to vector<2x8xf32>
    %79 = vector.shape_cast %78 : vector<2x8xf32> to vector<2x8x1xf32>
    %80 = vector.broadcast %79 : vector<2x8x1xf32> to vector<2x8x8xf32>
    %81 = arith.subf %77, %80 : vector<2x8x8xf32>
    %82 = math.exp %81 : vector<2x8x8xf32>
    %cst_31 = arith.constant dense<0.000000e+00> : vector<2x8xf32>
    %83 = vector.multi_reduction <add>, %82, %cst_31 [2] : vector<2x8x8xf32> to vector<2x8xf32>
    %84 = vector.shape_cast %83 : vector<2x8xf32> to vector<2x8x1xf32>
    %85 = tpu.reciprocal %84 : vector<2x8x1xf32> -> vector<2x8x1xf32>
    %86 = vector.broadcast %85 : vector<2x8x1xf32> to vector<2x8x8xf32>
    %87 = arith.mulf %82, %86 : vector<2x8x8xf32>
    %cst_32 = arith.constant dense<0.000000e+00> : vector<2x8x8xf32>
    %88 = tpu.matmul %87, %72, %cst_32 {dimension_numbers = #tpu.dot_dimension_numbers<[2], [1], [1], [2], [0, 0, 0, 1, 1, 2], [0], [0]>} : vector<2x8x8xf32>, vector<2x8x8xf32>, vector<2x8x8xf32> -> vector<2x8x8xf32>
    %89 = vector.shape_cast %88 : vector<2x8x8xf32> to vector<16x8xf32>
    %90 = vector.extract_strided_slice %13 {offsets = [16, 0], sizes = [8, 32], strides = [1, 1]} : vector<32x32xf32> to vector<8x32xf32>
    %cst_33 = arith.constant dense<0.000000e+00> : vector<16x32xf32>
    %91 = tpu.matmul %89, %90, %cst_33 {dimension_numbers = #tpu.dot_dimension_numbers<[1], [0], [0], [1], [0, 0, 1, 1], [], []>} : vector<16x8xf32>, vector<8x32xf32>, vector<16x32xf32> -> vector<16x32xf32>
    %92 = arith.addf %66, %91 : vector<16x32xf32>
    %93 = vector.extract_strided_slice %10 {offsets = [0, 24], sizes = [16, 8], strides = [1, 1]} : vector<16x32xf32> to vector<16x8xf32>
    %94 = vector.shape_cast %93 : vector<16x8xf32> to vector<2x8x8xf32>
    %95 = vector.extract_strided_slice %11 {offsets = [0, 24], sizes = [16, 8], strides = [1, 1]} : vector<16x32xf32> to vector<16x8xf32>
    %96 = vector.shape_cast %95 : vector<16x8xf32> to vector<2x8x8xf32>
    %97 = vector.extract_strided_slice %12 {offsets = [0, 24], sizes = [16, 8], strides = [1, 1]} : vector<16x32xf32> to vector<16x8xf32>
    %98 = vector.shape_cast %97 : vector<16x8xf32> to vector<2x8x8xf32>
    %cst_34 = arith.constant dense<0.000000e+00> : vector<2x8x8xf32>
    %99 = tpu.matmul %94, %96, %cst_34 {dimension_numbers = #tpu.dot_dimension_numbers<[2], [2], [1], [1], [0, 0, 0, 1, 1, 1], [0], [0]>} : vector<2x8x8xf32>, vector<2x8x8xf32>, vector<2x8x8xf32> -> vector<2x8x8xf32>
    %cst_35 = arith.constant 0.000000e+00 : f32
    %100 = vector.broadcast %cst_35 : f32 to vector<2x8x8xf32>
    %101 = arith.cmpf oeq, %2, %100 : vector<2x8x8xf32>
    %cst_36 = arith.constant -1.000000e+09 : f32
    %102 = vector.broadcast %cst_36 : f32 to vector<2x8x8xf32>
    %103 = arith.select %101, %102, %99 : vector<2x8x8xi1>, vector<2x8x8xf32>
    %cst_37 = arith.constant dense<0xFF800000> : vector<2x8xf32>
    %104 = vector.multi_reduction <maximumf>, %103, %cst_37 [2] : vector<2x8x8xf32> to vector<2x8xf32>
    %105 = vector.shape_cast %104 : vector<2x8xf32> to vector<2x8x1xf32>
    %106 = vector.broadcast %105 : vector<2x8x1xf32> to vector<2x8x8xf32>
    %107 = arith.subf %103, %106 : vector<2x8x8xf32>
    %108 = math.exp %107 : vector<2x8x8xf32>
    %cst_38 = arith.constant dense<0.000000e+00> : vector<2x8xf32>
    %109 = vector.multi_reduction <add>, %108, %cst_38 [2] : vector<2x8x8xf32> to vector<2x8xf32>
    %110 = vector.shape_cast %109 : vector<2x8xf32> to vector<2x8x1xf32>
    %111 = tpu.reciprocal %110 : vector<2x8x1xf32> -> vector<2x8x1xf32>
    %112 = vector.broadcast %111 : vector<2x8x1xf32> to vector<2x8x8xf32>
    %113 = arith.mulf %108, %112 : vector<2x8x8xf32>
    %cst_39 = arith.constant dense<0.000000e+00> : vector<2x8x8xf32>
    %114 = tpu.matmul %113, %98, %cst_39 {dimension_numbers = #tpu.dot_dimension_numbers<[2], [1], [1], [2], [0, 0, 0, 1, 1, 2], [0], [0]>} : vector<2x8x8xf32>, vector<2x8x8xf32>, vector<2x8x8xf32> -> vector<2x8x8xf32>
    %115 = vector.shape_cast %114 : vector<2x8x8xf32> to vector<16x8xf32>
    %116 = vector.extract_strided_slice %13 {offsets = [24, 0], sizes = [8, 32], strides = [1, 1]} : vector<32x32xf32> to vector<8x32xf32>
    %cst_40 = arith.constant dense<0.000000e+00> : vector<16x32xf32>
    %117 = tpu.matmul %115, %116, %cst_40 {dimension_numbers = #tpu.dot_dimension_numbers<[1], [0], [0], [1], [0, 0, 1, 1], [], []>} : vector<16x8xf32>, vector<8x32xf32>, vector<16x32xf32> -> vector<16x32xf32>
    %118 = arith.addf %92, %117 : vector<16x32xf32>
    %c0_41 = arith.constant 0 : index
    %c0_42 = arith.constant 0 : index
    %119 = vector.load %arg6[%c0_41, %c0_42] : memref<1x32xf32, #tpu.memory_space<vmem>>, vector<1x32xf32>
    %120 = vector.broadcast %119 : vector<1x32xf32> to vector<16x32xf32>
    %121 = arith.addf %118, %120 : vector<16x32xf32>
    %c0_43 = arith.constant 0 : index
    %c0_44 = arith.constant 0 : index
    %122 = vector.load %arg7[%c0_43, %c0_44] : memref<32x64xf32, #tpu.memory_space<vmem>>, vector<32x64xf32>
    %cst_45 = arith.constant dense<0.000000e+00> : vector<16x64xf32>
    %123 = tpu.matmul %121, %122, %cst_45 {dimension_numbers = #tpu.dot_dimension_numbers<[1], [0], [0], [1], [0, 0, 1, 1], [], []>} : vector<16x32xf32>, vector<32x64xf32>, vector<16x64xf32> -> vector<16x64xf32>
    %c0_46 = arith.constant 0 : index
    %c0_47 = arith.constant 0 : index
    %124 = vector.load %arg8[%c0_46, %c0_47] : memref<1x64xf32, #tpu.memory_space<vmem>>, vector<1x64xf32>
    %125 = vector.broadcast %124 : vector<1x64xf32> to vector<16x64xf32>
    %126 = arith.addf %123, %125 : vector<16x64xf32>
    %cst_48 = arith.constant 0.000000e+00 : f32
    %127 = vector.broadcast %cst_48 : f32 to vector<16x64xf32>
    %128 = arith.maximumf %126, %127 : vector<16x64xf32>
    %c0_49 = arith.constant 0 : index
    %c0_50 = arith.constant 0 : index
    %129 = vector.load %arg9[%c0_49, %c0_50] : memref<64x32xf32, #tpu.memory_space<vmem>>, vector<64x32xf32>
    %cst_51 = arith.constant dense<0.000000e+00> : vector<16x32xf32>
    %130 = tpu.matmul %128, %129, %cst_51 {dimension_numbers = #tpu.dot_dimension_numbers<[1], [0], [0], [1], [0, 0, 1, 1], [], []>} : vector<16x64xf32>, vector<64x32xf32>, vector<16x32xf32> -> vector<16x32xf32>
    %c0_52 = arith.constant 0 : index
    %c0_53 = arith.constant 0 : index
    %131 = vector.load %arg10[%c0_52, %c0_53] : memref<1x32xf32, #tpu.memory_space<vmem>>, vector<1x32xf32>
    %132 = vector.broadcast %131 : vector<1x32xf32> to vector<16x32xf32>
    %133 = arith.addf %130, %132 : vector<16x32xf32>
    %134 = vector.shape_cast %133 : vector<16x32xf32> to vector<2x8x32xf32>
    %c0_54 = arith.constant 0 : index
    %c0_55 = arith.constant 0 : index
    %c0_56 = arith.constant 0 : index
    %135 = vector.load %arg11[%c0_54, %c0_55, %c0_56] : memref<2x8x32xf32, #tpu.memory_space<vmem>>, vector<2x8x32xf32>
    tpu.vector_store %arg11[%c0_54, %c0_55, %c0_56], %134 {strides = array<i32>} : memref<2x8x32xf32, #tpu.memory_space<vmem>>, vector<2x8x32xf32>,
    return
  }
  func.func @transform_0(%arg0: i32) -> (i32, i32, i32) {
    %c0_i32 = arith.constant 0 : i32
    %c0_i32_0 = arith.constant 0 : i32
    %c0_i32_1 = arith.constant 0 : i32
    %c0_i32_2 = arith.constant 0 : i32
    return %c0_i32, %c0_i32_0, %c0_i32_1 : i32, i32, i32
  }
  func.func @transform_1(%arg0: i32) -> (i32, i32, i32) {
    %c0_i32 = arith.constant 0 : i32
    %c0_i32_0 = arith.constant 0 : i32
    %c0_i32_1 = arith.constant 0 : i32
    %c0_i32_2 = arith.constant 0 : i32
    return %c0_i32, %c0_i32_0, %c0_i32_1 : i32, i32, i32
  }
  func.func @transform_2(%arg0: i32) -> (i32, i32) {
    %c0_i32 = arith.constant 0 : i32
    %c0_i32_0 = arith.constant 0 : i32
    %c0_i32_1 = arith.constant 0 : i32
    return %c0_i32, %c0_i32_0 : i32, i32
  }
  func.func @transform_3(%arg0: i32) -> (i32, i32) {
    %c0_i32 = arith.constant 0 : i32
    %c0_i32_0 = arith.constant 0 : i32
    %c0_i32_1 = arith.constant 0 : i32
    return %c0_i32, %c0_i32_0 : i32, i32
  }
  func.func @transform_4(%arg0: i32) -> (i32, i32) {
    %c0_i32 = arith.constant 0 : i32
    %c0_i32_0 = arith.constant 0 : i32
    %c0_i32_1 = arith.constant 0 : i32
    return %c0_i32, %c0_i32_0 : i32, i32
  }
  func.func @transform_5(%arg0: i32) -> (i32, i32) {
    %c0_i32 = arith.constant 0 : i32
    %c0_i32_0 = arith.constant 0 : i32
    %c0_i32_1 = arith.constant 0 : i32
    return %c0_i32, %c0_i32_0 : i32, i32
  }
  func.func @transform_6(%arg0: i32) -> (i32, i32) {
    %c0_i32 = arith.constant 0 : i32
    %c0_i32_0 = arith.constant 0 : i32
    %c0_i32_1 = arith.constant 0 : i32
    return %c0_i32, %c0_i32_0 : i32, i32
  }
  func.func @transform_7(%arg0: i32) -> (i32, i32) {
    %c0_i32 = arith.constant 0 : i32
    %c0_i32_0 = arith.constant 0 : i32
    %c0_i32_1 = arith.constant 0 : i32
    return %c0_i32, %c0_i32_0 : i32, i32
  }
  func.func @transform_8(%arg0: i32) -> (i32, i32) {
    %c0_i32 = arith.constant 0 : i32
    %c0_i32_0 = arith.constant 0 : i32
    %c0_i32_1 = arith.constant 0 : i32
    return %c0_i32, %c0_i32_0 : i32, i32
  }
  func.func @transform_9(%arg0: i32) -> (i32, i32) {
    %c0_i32 = arith.constant 0 : i32
    %c0_i32_0 = arith.constant 0 : i32
    %c0_i32_1 = arith.constant 0 : i32
    return %c0_i32, %c0_i32_0 : i32, i32
  }
  func.func @transform_10(%arg0: i32) -> (i32, i32, i32) {
    %c0_i32 = arith.constant 0 : i32
    %c0_i32_0 = arith.constant 0 : i32
    %c0_i32_1 = arith.constant 0 : i32
    %c0_i32_2 = arith.constant 0 : i32
    return %c0_i32, %c0_i32_0, %c0_i32_1 : i32, i32, i32
  }
}

</mosaic_0001>

<llo_original>
// kernel: tpu_custom_call.1
$region0: #{tpu_custom_call.1}
  #allocation0 [shape = 'u32[]', space=smem, size = 0x4, offset = 0x4, fixed_abs, tag = 'smem constant byte address 0x4 - core index']
  #allocation1 [shape = 'u32[144,128]{1,0:T(1,128)}', space=vmem, size = 0x12000, scoped, tag = 'internal scratch']
  %s0 = inlined_call_operand.hbm [shape: f32[2,8,32], index: 0, kind: input, shape index: {}]
  %s1 = inlined_call_operand.hbm [shape: f32[2,8,8], index: 1, kind: input, shape index: {}]
  %s2 = inlined_call_operand.vmem [shape: f32[32,96], index: 2, kind: input, shape index: {}]
  %s3 = inlined_call_operand.vmem [shape: f32[1,96], index: 3, kind: input, shape index: {}]
  %s4 = inlined_call_operand.vmem [shape: f32[32,32], index: 4, kind: input, shape index: {}]
  %s5 = inlined_call_operand.vmem [shape: f32[1,32], index: 5, kind: input, shape index: {}]
  %s6 = inlined_call_operand.vmem [shape: f32[32,64], index: 6, kind: input, shape index: {}]
  %s7 = inlined_call_operand.vmem [shape: f32[1,64], index: 7, kind: input, shape index: {}]
  %s8 = inlined_call_operand.vmem [shape: f32[64,32], index: 8, kind: input, shape index: {}]
  %s9 = inlined_call_operand.vmem [shape: f32[1,32], index: 9, kind: input, shape index: {}]
  %s10 = inlined_call_operand.hbm [shape: f32[2,8,32], index: 10, kind: output, shape index: {}]
  %s11 = sld [smem:[#allocation0]]
  $region58: #{tpu_custom_call.1} parent=0
    _
  %s13 = ssub.s32 1, %s11
  %s14 = scalar_select 0, %s13, %s11
  $region1: #{tpu_custom_call.1} parent=0
    #allocation2 [shape = 'u8[8192]{0}', space=vmem, size = 0x2000, scoped, tag = 'input window, operand 0, single buffered']
    #allocation3 [shape = 's32[1]{0}', space=sflag, size = 0x4, scoped, tag = 'scoped memory for tpu_custom_call.1']
    #allocation4 [shape = 's32[1]{0}', space=sflag, size = 0x4, scoped, tag = 'scoped memory for tpu_custom_call.1']
    #allocation5 [shape = 'u8[8192]{0}', space=vmem, size = 0x2000, scoped, tag = 'input window, operand 1, single buffered']
    #allocation6 [shape = 's32[1]{0}', space=sflag, size = 0x4, scoped, tag = 'scoped memory for tpu_custom_call.1']
    #allocation7 [shape = 'u8[8192]{0}', space=vmem, size = 0x2000, scoped, tag = 'output window, operand 0, single buffered']
    %15 = vsyncpa [#allocation3], 0
    %16 = vsyncpa [#allocation6], 0
    %17 = vsyncpa [#allocation4], 0
    // Predicated region
    $region2: #{tpu_custom_call.1} parent=1 // pred_check
      _
    $region3: #{tpu_custom_call.1} parent=1 // pred_check_branch
      %19 = sbr.rel (0) target = $region5
    $region4: #{tpu_custom_call.1} parent=1 // pred_region
      %s21 = ssub.s32 256, 256
      %22 = vsyncadd [#allocation3], %s21
      %s23 = sshll.u32 [#allocation2], 4
      %s24 = int_to_ptr.vmem [resolvable:$true] %s23
      %29 = dma.hbm_to_vmem [thread:$0]  %s0, 256, %s24, [#allocation3], 128, 128, 8
    $region5: #{tpu_custom_call.1} parent=1 // pred_fallthru
      _
    // Predicated region
    $region6: #{tpu_custom_call.1} parent=1 // pred_check
      _
    $region7: #{tpu_custom_call.1} parent=1 // pred_check_branch
      %31 = sbr.rel (0) target = $region9
    $region8: #{tpu_custom_call.1} parent=1 // pred_region
      %s33 = ssub.s32 256, 256
      %34 = vsyncadd [#allocation6], %s33
      %s35 = sshll.u32 [#allocation5], 4
      %s36 = int_to_ptr.vmem [resolvable:$true] %s35
      %41 = dma.hbm_to_vmem [thread:$0]  %s1, 256, %s36, [#allocation6], 128, 128, 8
    $region9: #{tpu_custom_call.1} parent=1 // pred_fallthru
      _
    // Predicated region
    $region10: #{tpu_custom_call.1} parent=1 // pred_check
      _
    $region11: #{tpu_custom_call.1} parent=1 // pred_check_branch
      %43 = sbr.rel (0) target = $region13
    $region12: #{tpu_custom_call.1} parent=1 // pred_region
      _
    $region13: #{tpu_custom_call.1} parent=1 // pred_fallthru
      _
    // Predicated region
    $region14: #{tpu_custom_call.1} parent=1 // pred_check
      _
    $region15: #{tpu_custom_call.1} parent=1 // pred_check_branch
      %45 = sbr.rel (0) target = $region17
    $region16: #{tpu_custom_call.1} parent=1 // pred_region
      _
    $region17: #{tpu_custom_call.1} parent=1 // pred_fallthru
      _
    // Predicated region
    $region18: #{tpu_custom_call.1} parent=1 // pred_check
      _
    $region19: #{tpu_custom_call.1} parent=1 // pred_check_branch
      %47 = sbr.rel (0) target = $region21
    $region20: #{tpu_custom_call.1} parent=1 // pred_region
      _
    $region21: #{tpu_custom_call.1} parent=1 // pred_fallthru
      _
    // Predicated region
    $region22: #{tpu_custom_call.1} parent=1 // pred_check
      _
    $region23: #{tpu_custom_call.1} parent=1 // pred_check_branch
      %49 = sbr.rel (0) target = $region25
    $region24: #{tpu_custom_call.1} parent=1 // pred_region
      _
    $region25: #{tpu_custom_call.1} parent=1 // pred_fallthru
      _
    // Predicated region
    $region26: #{tpu_custom_call.1} parent=1 // pred_check
      _
    $region27: #{tpu_custom_call.1} parent=1 // pred_check_branch
      %51 = sbr.rel (0) target = $region29
    $region28: #{tpu_custom_call.1} parent=1 // pred_region
      _
    $region29: #{tpu_custom_call.1} parent=1 // pred_fallthru
      _
    // Predicated region
    $region30: #{tpu_custom_call.1} parent=1 // pred_check
      _
    $region31: #{tpu_custom_call.1} parent=1 // pred_check_branch
      %53 = sbr.rel (0) target = $region33
    $region32: #{tpu_custom_call.1} parent=1 // pred_region
      _
    $region33: #{tpu_custom_call.1} parent=1 // pred_fallthru
      _
    // Predicated region
    $region34: #{tpu_custom_call.1} parent=1 // pred_check
      _
    $region35: #{tpu_custom_call.1} parent=1 // pred_check_branch
      %55 = sbr.rel (0) target = $region37
    $region36: #{tpu_custom_call.1} parent=1 // pred_region
      _
    $region37: #{tpu_custom_call.1} parent=1 // pred_fallthru
      _
    // Predicated region
    $region38: #{tpu_custom_call.1} parent=1 // pred_check
      _
    $region39: #{tpu_custom_call.1} parent=1 // pred_check_branch
      %57 = sbr.rel (0) target = $region41
    $region40: #{tpu_custom_call.1} parent=1 // pred_region
      _
    $region41: #{tpu_custom_call.1} parent=1 // pred_fallthru
      _
    // Predicated region
    $region42: #{tpu_custom_call.1} parent=1 // pred_check
      _
    $region43: #{tpu_custom_call.1} parent=1 // pred_check_branch
      %59 = sbr.rel (0) target = $region45
    $region44: #{tpu_custom_call.1} parent=1 // pred_region
      %60 = dma.done [#allocation3], 256
    $region45: #{tpu_custom_call.1} parent=1 // pred_fallthru
      _
    // Predicated region
    $region46: #{tpu_custom_call.1} parent=1 // pred_check
      _
    $region47: #{tpu_custom_call.1} parent=1 // pred_check_branch
      %62 = sbr.rel (0) target = $region49
    $region48: #{tpu_custom_call.1} parent=1 // pred_region
      %63 = dma.done [#allocation6], 256
    $region49: #{tpu_custom_call.1} parent=1 // pred_fallthru
      _
    %v64 = vld [vmem:[#allocation2] sm:$0xff]
    %v65 = vld [vmem:[#allocation2 + $0x8] sm:$0xff]
    %v66 = vld [vmem:[#allocation5] sm:$0xff]
    %v67 = vld [vmem:[#allocation5 + $0x8] sm:$0xff]
    %v68 = vld [vmem:[%s2] sm:$0xff]
    %v69 = vld [vmem:[%s2 + $0x8] sm:$0xff]
    %v70 = vld [vmem:[%s2 + $0x10] sm:$0xff]
    %v71 = vld [vmem:[%s2 + $0x18] sm:$0xff]
    %v72 = vld [vmem:[%s3] sm:$0x1]
    %v74 = vlaneseq
    %v75 = vshrl.u32 %v74, 7
    %v76 = vsub.s32 0, %v75
    %v77 = vrot.slane %v72, %v76
    %vm79 = vcmask 261120
    %v81 = vsel %vm79, %v64, 0
    %v84 = vsel %vm79, %v65, 0
    %86 = vmatprep.subr.mxu0 0.0
    %87 = vmatpush1.msra.mxu0 %v68
    %88 = vmatprep.subr.mxu0 0.0
    %89 = vmatpush1.msra.mxu0 %v69
    %90 = vmatprep.subr.mxu0 0.0
    %91 = vmatpush1.msra.mxu0 %v70
    %92 = vmatprep.subr.mxu0 0.0
    %93 = vmatpush1.msra.mxu0 %v71
    %94 = vmatprep.subr.mxu0 0.0
    %95 = vmatpush1.msra.mxu0 0.0
    %96 = vmatprep.subr.mxu0 0.0
    %97 = vmatpush1.msra.mxu0 0.0
    %98 = vmatprep.subr.mxu0 0.0
    %99 = vmatpush1.msra.mxu0 0.0
    %100 = vmatprep.subr.mxu0 0.0
    %101 = vmatpush1.msra.mxu0 0.0
    %102 = vmatprep.subr.mxu0 0.0
    %103 = vmatpush1.msra.mxu0 0.0
    %104 = vmatprep.subr.mxu0 0.0
    %105 = vmatpush1.msra.mxu0 0.0
    %106 = vmatprep.subr.mxu0 0.0
    %107 = vmatpush1.msra.mxu0 0.0
    %108 = vmatprep.subr.mxu0 0.0
    %109 = vmatpush1.msra.mxu0 0.0
    %110 = vmatprep.subr.mxu0 0.0
    %111 = vmatpush1.msra.mxu0 0.0
    %112 = vmatprep.subr.mxu0 0.0
    %113 = vmatpush1.msra.mxu0 0.0
    %114 = vmatprep.subr.mxu0 0.0
    %115 = vmatpush1.msra.mxu0 0.0
    %116 = vmatprep.subr.mxu0 0.0
    %117 = vmatpush1.msra.mxu0 0.0
    %118 = vmatprep.subr.mxu0 0.0
    %119 = vmatpush1.msra.mxu0 0.0
    %120 = vmatprep.subr.mxu0 0.0
    %121 = vmatpush1.msra.mxu0 0.0
    %122 = vmatprep.subr.mxu0 0.0
    %123 = vmatpush1.msra.mxu0 0.0
    %124 = vmatprep.subr.mxu0 0.0
    %125 = vmatpush1.msra.mxu0 0.0
    %126 = vmatprep.subr.mxu0 0.0
    %127 = vmatpush1.msra.mxu0 0.0
    %128 = vmatprep.subr.mxu0 0.0
    %129 = vmatpush1.msra.mxu0 0.0
    %130 = vmatprep.subr.mxu0 0.0
    %131 = vmatpush1.msra.mxu0 0.0
    %132 = vmatprep.subr.mxu0 0.0
    %133 = vmatpush1.msra.mxu0 0.0
    %134 = vmatprep.subr.mxu0 0.0
    %135 = vmatpush1.msra.mxu0 0.0
    %136 = vmatprep.subr.mxu0 0.0
    %137 = vmatpush1.msra.mxu0 0.0
    %138 = vmatprep.subr.mxu0 0.0
    %139 = vmatpush1.msra.mxu0 0.0
    %140 = vmatprep.subr.mxu0 0.0
    %141 = vmatpush1.msra.mxu0 0.0
    %142 = vmatprep.subr.mxu0 0.0
    %143 = vmatpush1.msra.mxu0 0.0
    %144 = vmatprep.subr.mxu0 0.0
    %145 = vmatpush1.msra.mxu0 0.0
    %146 = vmatprep.subr.mxu0 0.0
    %147 = vmatpush1.msra.mxu0 0.0
    %148 = vmatprep.subr.mxu0 0.0
    %149 = vmatpush1.msra.mxu0 0.0
    %150 = vmatprep.mubr.f32.mxu0 0.0
    %151 = vmatmul.mubr.f32.gmra.mrb[0].mxu0 %v81
    %v152 = vpop.f32.mrb[0].mxu0
    %v153 = vadd.f32 %v77, %v152
    %v154 = vpop.f32.mrb[0].mxu0
    %155 = vmatprep.mubr.f32.mxu0 0.0
    %156 = vmatmul.mubr.f32.gmra.mrb[0].mxu0 %v84
    %v157 = vpop.f32.mrb[0].mxu0
    %v158 = vadd.f32 %v77, %v157
    %v159 = vpop.f32.mrb[0].mxu0
    %160 = vdwg.mxu0
    %v161 = vmul.f32 %v153, 0.35355338
    %v162 = vmul.f32 %v158, 0.35355338
    %v163 = vld [vmem:[%s4] sm:$0xff]
    %v164 = vld [vmem:[%s4 + $0x8] sm:$0xff]
    %v165 = vld [vmem:[%s4 + $0x10] sm:$0xff]
    %v166 = vld [vmem:[%s4 + $0x18] sm:$0xff]
    %168 = vrot.lane.b32.xlu0 %v153, 96
    %v169 = vpop.permute.xlu0 %168
    %vm170 = vcmask 64512
    %v172 = vsel %vm170, %v161, 0
    %v174 = vsel %vm170, %v169, 0
    %176 = vmatprep.subr.mxu0 0.0
    %177 = vmatpush1.xpose.msra.mxu0 %v174
    %178 = vmatprep.subr.mxu0 0.0
    %179 = vmatpush1.xpose.msra.mxu0 0.0
    %180 = vmatprep.subr.mxu0 0.0
    %181 = vmatpush1.xpose.msra.mxu0 0.0
    %182 = vmatprep.subr.mxu0 0.0
    %183 = vmatpush1.xpose.msra.mxu0 0.0
    %184 = vmatprep.subr.mxu0 0.0
    %185 = vmatpush1.xpose.msra.mxu0 0.0
    %186 = vmatprep.subr.mxu0 0.0
    %187 = vmatpush1.xpose.msra.mxu0 0.0
    %188 = vmatprep.subr.mxu0 0.0
    %189 = vmatpush1.xpose.msra.mxu0 0.0
    %190 = vmatprep.subr.mxu0 0.0
    %191 = vmatpush1.xpose.msra.mxu0 0.0
    %192 = vmatprep.subr.mxu0 0.0
    %193 = vmatpush1.xpose.msra.mxu0 0.0
    %194 = vmatprep.subr.mxu0 0.0
    %195 = vmatpush1.xpose.msra.mxu0 0.0
    %196 = vmatprep.subr.mxu0 0.0
    %197 = vmatpush1.xpose.msra.mxu0 0.0
    %198 = vmatprep.subr.mxu0 0.0
    %199 = vmatpush1.xpose.msra.mxu0 0.0
    %200 = vmatprep.subr.mxu0 0.0
    %201 = vmatpush1.xpose.msra.mxu0 0.0
    %202 = vmatprep.subr.mxu0 0.0
    %203 = vmatpush1.xpose.msra.mxu0 0.0
    %204 = vmatprep.subr.mxu0 0.0
    %205 = vmatpush1.xpose.msra.mxu0 0.0
    %206 = vmatprep.subr.mxu0 0.0
    %207 = vmatpush1.xpose.msra.mxu0 0.0
    %208 = vmatprep.subr.mxu0 0.0
    %209 = vmatpush1.xpose.msra.mxu0 0.0
    %210 = vmatprep.subr.mxu0 0.0
    %211 = vmatpush1.xpose.msra.mxu0 0.0
    %212 = vmatprep.subr.mxu0 0.0
    %213 = vmatpush1.xpose.msra.mxu0 0.0
    %214 = vmatprep.subr.mxu0 0.0
    %215 = vmatpush1.xpose.msra.mxu0 0.0
    %216 = vmatprep.subr.mxu0 0.0
    %217 = vmatpush1.xpose.msra.mxu0 0.0
    %218 = vmatprep.subr.mxu0 0.0
    %219 = vmatpush1.xpose.msra.mxu0 0.0
    %220 = vmatprep.subr.mxu0 0.0
    %221 = vmatpush1.xpose.msra.mxu0 0.0
    %222 = vmatprep.subr.mxu0 0.0
    %223 = vmatpush1.xpose.msra.mxu0 0.0
    %224 = vmatprep.subr.mxu0 0.0
    %225 = vmatpush1.xpose.msra.mxu0 0.0
    %226 = vmatprep.subr.mxu0 0.0
    %227 = vmatpush1.xpose.msra.mxu0 0.0
    %228 = vmatprep.subr.mxu0 0.0
    %229 = vmatpush1.xpose.msra.mxu0 0.0
    %230 = vmatprep.subr.mxu0 0.0
    %231 = vmatpush1.xpose.msra.mxu0 0.0
    %232 = vmatprep.subr.mxu0 0.0
    %233 = vmatpush1.xpose.msra.mxu0 0.0
    %234 = vmatprep.subr.mxu0 0.0
    %235 = vmatpush1.xpose.msra.mxu0 0.0
    %236 = vmatprep.subr.mxu0 0.0
    %237 = vmatpush1.xpose.msra.mxu0 0.0
    %238 = vmatprep.subr.mxu0 0.0
    %239 = vmatpush1.xpose.msra.mxu0 0.0
    %240 = vmatprep.mubr.f32.mxu0 0.0
    %241 = vmatmul.mubr.f32.gmra.mrb[0].mxu0 %v172
    %v242 = vpop.f32.mrb[0].mxu0
    %v243 = vadd.f32 0.0, %v242
    %v244 = vpop.f32.mrb[0].mxu0
    %245 = vdwg.mxu0
    %247 = vrot.lane.b32.xlu0 %v158, 96
    %v248 = vpop.permute.xlu0 %247
    %v250 = vsel %vm170, %v162, 0
    %v252 = vsel %vm170, %v248, 0
    %254 = vmatprep.subr.mxu0 0.0
    %255 = vmatpush1.xpose.msra.mxu0 %v252
    %256 = vmatprep.subr.mxu0 0.0
    %257 = vmatpush1.xpose.msra.mxu0 0.0
    %258 = vmatprep.subr.mxu0 0.0
    %259 = vmatpush1.xpose.msra.mxu0 0.0
    %260 = vmatprep.subr.mxu0 0.0
    %261 = vmatpush1.xpose.msra.mxu0 0.0
    %262 = vmatprep.subr.mxu0 0.0
    %263 = vmatpush1.xpose.msra.mxu0 0.0
    %264 = vmatprep.subr.mxu0 0.0
    %265 = vmatpush1.xpose.msra.mxu0 0.0
    %266 = vmatprep.subr.mxu0 0.0
    %267 = vmatpush1.xpose.msra.mxu0 0.0
    %268 = vmatprep.subr.mxu0 0.0
    %269 = vmatpush1.xpose.msra.mxu0 0.0
    %270 = vmatprep.subr.mxu0 0.0
    %271 = vmatpush1.xpose.msra.mxu0 0.0
    %272 = vmatprep.subr.mxu0 0.0
    %273 = vmatpush1.xpose.msra.mxu0 0.0
    %274 = vmatprep.subr.mxu0 0.0
    %275 = vmatpush1.xpose.msra.mxu0 0.0
    %276 = vmatprep.subr.mxu0 0.0
    %277 = vmatpush1.xpose.msra.mxu0 0.0
    %278 = vmatprep.subr.mxu0 0.0
    %279 = vmatpush1.xpose.msra.mxu0 0.0
    %280 = vmatprep.subr.mxu0 0.0
    %281 = vmatpush1.xpose.msra.mxu0 0.0
    %282 = vmatprep.subr.mxu0 0.0
    %283 = vmatpush1.xpose.msra.mxu0 0.0
    %284 = vmatprep.subr.mxu0 0.0
    %285 = vmatpush1.xpose.msra.mxu0 0.0
    %286 = vmatprep.subr.mxu0 0.0
    %287 = vmatpush1.xpose.msra.mxu0 0.0
    %288 = vmatprep.subr.mxu0 0.0
    %289 = vmatpush1.xpose.msra.mxu0 0.0
    %290 = vmatprep.subr.mxu0 0.0
    %291 = vmatpush1.xpose.msra.mxu0 0.0
    %292 = vmatprep.subr.mxu0 0.0
    %293 = vmatpush1.xpose.msra.mxu0 0.0
    %294 = vmatprep.subr.mxu0 0.0
    %295 = vmatpush1.xpose.msra.mxu0 0.0
    %296 = vmatprep.subr.mxu0 0.0
    %297 = vmatpush1.xpose.msra.mxu0 0.0
    %298 = vmatprep.subr.mxu0 0.0
    %299 = vmatpush1.xpose.msra.mxu0 0.0
    %300 = vmatprep.subr.mxu0 0.0
    %301 = vmatpush1.xpose.msra.mxu0 0.0
    %302 = vmatprep.subr.mxu0 0.0
    %303 = vmatpush1.xpose.msra.mxu0 0.0
    %304 = vmatprep.subr.mxu0 0.0
    %305 = vmatpush1.xpose.msra.mxu0 0.0
    %306 = vmatprep.subr.mxu0 0.0
    %307 = vmatpush1.xpose.msra.mxu0 0.0
    %308 = vmatprep.subr.mxu0 0.0
    %309 = vmatpush1.xpose.msra.mxu0 0.0
    %310 = vmatprep.subr.mxu0 0.0
    %311 = vmatpush1.xpose.msra.mxu0 0.0
    %312 = vmatprep.subr.mxu0 0.0
    %313 = vmatpush1.xpose.msra.mxu0 0.0
    %314 = vmatprep.subr.mxu0 0.0
    %315 = vmatpush1.xpose.msra.mxu0 0.0
    %316 = vmatprep.subr.mxu0 0.0
    %317 = vmatpush1.xpose.msra.mxu0 0.0
    %318 = vmatprep.mubr.f32.mxu0 0.0
    %319 = vmatmul.mubr.f32.gmra.mrb[0].mxu0 %v250
    %v320 = vpop.f32.mrb[0].mxu0
    %v321 = vadd.f32 0.0, %v320
    %v322 = vpop.f32.mrb[0].mxu0
    %323 = vdwg.mxu0
    %vm324 = vcmp.eq.f32.partialorder %v66, 0.0
    %vm325 = vcmp.eq.f32.partialorder %v67, 0.0
    %v326 = vsel %vm324, -1e+09, %v243
    %v327 = vsel %vm325, -1e+09, %v321
    %v328 = vsel %vm170, %v326, -inf
    %329 = vmax.xlane.f32.xlu0 %v328
    %v330 = vpop.xlane.xlu0 %329
    %v331 = vsel %vm170, %v327, -inf
    %332 = vmax.xlane.f32.xlu0 %v331
    %v333 = vpop.xlane.xlu0 %332
    %v334 = vsub.f32 %v326, %v330
    %v335 = vsub.f32 %v327, %v333
    %v336 = vmul.f32 %v334, 1.442695
    %v337 = vpow.pop %v336
    %v338 = vmul.f32 %v335, 1.442695
    %v339 = vpow.pop %v338
    %v340 = vsel %vm170, %v337, 0.0
    %341 = vadd.xlane.f32.xlu0 %v340
    %v342 = vpop.xlane.xlu0 %341
    %v343 = vsel %vm170, %v339, 0.0
    %344 = vadd.xlane.f32.xlu0 %v343
    %v345 = vpop.xlane.xlu0 %344
    %v346 = vrcp.pop %v342
    %v347 = vrcp.pop %v345
    %v348 = vmul.f32 %v337, %v346
    %v349 = vmul.f32 %v339, %v347
    %350 = vrot.lane.b32.xlu0 %v153, 64
    %v351 = vpop.permute.xlu0 %350
    %v354 = vsel %vm170, %v348, 0
    %356 = vmatprep.subr.mxu0 0.0
    %357 = vmatpush1.msra.mxu0 %v351
    %358 = vmatprep.subr.mxu0 0.0
    %359 = vmatpush1.msra.mxu0 0.0
    %360 = vmatprep.subr.mxu0 0.0
    %361 = vmatpush1.msra.mxu0 0.0
    %362 = vmatprep.subr.mxu0 0.0
    %363 = vmatpush1.msra.mxu0 0.0
    %364 = vmatprep.subr.mxu0 0.0
    %365 = vmatpush1.msra.mxu0 0.0
    %366 = vmatprep.subr.mxu0 0.0
    %367 = vmatpush1.msra.mxu0 0.0
    %368 = vmatprep.subr.mxu0 0.0
    %369 = vmatpush1.msra.mxu0 0.0
    %370 = vmatprep.subr.mxu0 0.0
    %371 = vmatpush1.msra.mxu0 0.0
    %372 = vmatprep.subr.mxu0 0.0
    %373 = vmatpush1.msra.mxu0 0.0
    %374 = vmatprep.subr.mxu0 0.0
    %375 = vmatpush1.msra.mxu0 0.0
    %376 = vmatprep.subr.mxu0 0.0
    %377 = vmatpush1.msra.mxu0 0.0
    %378 = vmatprep.subr.mxu0 0.0
    %379 = vmatpush1.msra.mxu0 0.0
    %380 = vmatprep.subr.mxu0 0.0
    %381 = vmatpush1.msra.mxu0 0.0
    %382 = vmatprep.subr.mxu0 0.0
    %383 = vmatpush1.msra.mxu0 0.0
    %384 = vmatprep.subr.mxu0 0.0
    %385 = vmatpush1.msra.mxu0 0.0
    %386 = vmatprep.subr.mxu0 0.0
    %387 = vmatpush1.msra.mxu0 0.0
    %388 = vmatprep.subr.mxu0 0.0
    %389 = vmatpush1.msra.mxu0 0.0
    %390 = vmatprep.subr.mxu0 0.0
    %391 = vmatpush1.msra.mxu0 0.0
    %392 = vmatprep.subr.mxu0 0.0
    %393 = vmatpush1.msra.mxu0 0.0
    %394 = vmatprep.subr.mxu0 0.0
    %395 = vmatpush1.msra.mxu0 0.0
    %396 = vmatprep.subr.mxu0 0.0
    %397 = vmatpush1.msra.mxu0 0.0
    %398 = vmatprep.subr.mxu0 0.0
    %399 = vmatpush1.msra.mxu0 0.0
    %400 = vmatprep.subr.mxu0 0.0
    %401 = vmatpush1.msra.mxu0 0.0
    %402 = vmatprep.subr.mxu0 0.0
    %403 = vmatpush1.msra.mxu0 0.0
    %404 = vmatprep.subr.mxu0 0.0
    %405 = vmatpush1.msra.mxu0 0.0
    %406 = vmatprep.subr.mxu0 0.0
    %407 = vmatpush1.msra.mxu0 0.0
    %408 = vmatprep.subr.mxu0 0.0
    %409 = vmatpush1.msra.mxu0 0.0
    %410 = vmatprep.subr.mxu0 0.0
    %411 = vmatpush1.msra.mxu0 0.0
    %412 = vmatprep.subr.mxu0 0.0
    %413 = vmatpush1.msra.mxu0 0.0
    %414 = vmatprep.subr.mxu0 0.0
    %415 = vmatpush1.msra.mxu0 0.0
    %416 = vmatprep.subr.mxu0 0.0
    %417 = vmatpush1.msra.mxu0 0.0
    %418 = vmatprep.subr.mxu0 0.0
    %419 = vmatpush1.msra.mxu0 0.0
    %420 = vmatprep.mubr.f32.mxu0 0.0
    %421 = vmatmul.mubr.f32.gmra.mrb[0].mxu0 %v354
    %v422 = vpop.f32.mrb[0].mxu0
    %v423 = vadd.f32 0.0, %v422
    %v424 = vpop.f32.mrb[0].mxu0
    %425 = vdwg.mxu0
    %426 = vrot.lane.b32.xlu0 %v158, 64
    %v427 = vpop.permute.xlu0 %426
    %v430 = vsel %vm170, %v349, 0
    %432 = vmatprep.subr.mxu0 0.0
    %433 = vmatpush1.msra.mxu0 %v427
    %434 = vmatprep.subr.mxu0 0.0
    %435 = vmatpush1.msra.mxu0 0.0
    %436 = vmatprep.subr.mxu0 0.0
    %437 = vmatpush1.msra.mxu0 0.0
    %438 = vmatprep.subr.mxu0 0.0
    %439 = vmatpush1.msra.mxu0 0.0
    %440 = vmatprep.subr.mxu0 0.0
    %441 = vmatpush1.msra.mxu0 0.0
    %442 = vmatprep.subr.mxu0 0.0
    %443 = vmatpush1.msra.mxu0 0.0
    %444 = vmatprep.subr.mxu0 0.0
    %445 = vmatpush1.msra.mxu0 0.0
    %446 = vmatprep.subr.mxu0 0.0
    %447 = vmatpush1.msra.mxu0 0.0
    %448 = vmatprep.subr.mxu0 0.0
    %449 = vmatpush1.msra.mxu0 0.0
    %450 = vmatprep.subr.mxu0 0.0
    %451 = vmatpush1.msra.mxu0 0.0
    %452 = vmatprep.subr.mxu0 0.0
    %453 = vmatpush1.msra.mxu0 0.0
    %454 = vmatprep.subr.mxu0 0.0
    %455 = vmatpush1.msra.mxu0 0.0
    %456 = vmatprep.subr.mxu0 0.0
    %457 = vmatpush1.msra.mxu0 0.0
    %458 = vmatprep.subr.mxu0 0.0
    %459 = vmatpush1.msra.mxu0 0.0
    %460 = vmatprep.subr.mxu0 0.0
    %461 = vmatpush1.msra.mxu0 0.0
    %462 = vmatprep.subr.mxu0 0.0
    %463 = vmatpush1.msra.mxu0 0.0
    %464 = vmatprep.subr.mxu0 0.0
    %465 = vmatpush1.msra.mxu0 0.0
    %466 = vmatprep.subr.mxu0 0.0
    %467 = vmatpush1.msra.mxu0 0.0
    %468 = vmatprep.subr.mxu0 0.0
    %469 = vmatpush1.msra.mxu0 0.0
    %470 = vmatprep.subr.mxu0 0.0
    %471 = vmatpush1.msra.mxu0 0.0
    %472 = vmatprep.subr.mxu0 0.0
    %473 = vmatpush1.msra.mxu0 0.0
    %474 = vmatprep.subr.mxu0 0.0
    %475 = vmatpush1.msra.mxu0 0.0
    %476 = vmatprep.subr.mxu0 0.0
    %477 = vmatpush1.msra.mxu0 0.0
    %478 = vmatprep.subr.mxu0 0.0
    %479 = vmatpush1.msra.mxu0 0.0
    %480 = vmatprep.subr.mxu0 0.0
    %481 = vmatpush1.msra.mxu0 0.0
    %482 = vmatprep.subr.mxu0 0.0
    %483 = vmatpush1.msra.mxu0 0.0
    %484 = vmatprep.subr.mxu0 0.0
    %485 = vmatpush1.msra.mxu0 0.0
    %486 = vmatprep.subr.mxu0 0.0
    %487 = vmatpush1.msra.mxu0 0.0
    %488 = vmatprep.subr.mxu0 0.0
    %489 = vmatpush1.msra.mxu0 0.0
    %490 = vmatprep.subr.mxu0 0.0
    %491 = vmatpush1.msra.mxu0 0.0
    %492 = vmatprep.subr.mxu0 0.0
    %493 = vmatpush1.msra.mxu0 0.0
    %494 = vmatprep.subr.mxu0 0.0
    %495 = vmatpush1.msra.mxu0 0.0
    %496 = vmatprep.mubr.f32.mxu0 0.0
    %497 = vmatmul.mubr.f32.gmra.mrb[0].mxu0 %v430
    %v498 = vpop.f32.mrb[0].mxu0
    %v499 = vadd.f32 0.0, %v498
    %v500 = vpop.f32.mrb[0].mxu0
    %501 = vdwg.mxu0
    %502 = vrot.lane.b32.xlu0 %v161, 120
    %v503 = vpop.permute.xlu0 %502
    %504 = vrot.lane.b32.xlu0 %v153, 88
    %v505 = vpop.permute.xlu0 %504
    %v506 = vsel %vm170, %v503, 0
    %v508 = vsel %vm170, %v505, 0
    %510 = vmatprep.subr.mxu0 0.0
    %511 = vmatpush1.xpose.msra.mxu0 %v508
    %512 = vmatprep.subr.mxu0 0.0
    %513 = vmatpush1.xpose.msra.mxu0 0.0
    %514 = vmatprep.subr.mxu0 0.0
    %515 = vmatpush1.xpose.msra.mxu0 0.0
    %516 = vmatprep.subr.mxu0 0.0
    %517 = vmatpush1.xpose.msra.mxu0 0.0
    %518 = vmatprep.subr.mxu0 0.0
    %519 = vmatpush1.xpose.msra.mxu0 0.0
    %520 = vmatprep.subr.mxu0 0.0
    %521 = vmatpush1.xpose.msra.mxu0 0.0
    %522 = vmatprep.subr.mxu0 0.0
    %523 = vmatpush1.xpose.msra.mxu0 0.0
    %524 = vmatprep.subr.mxu0 0.0
    %525 = vmatpush1.xpose.msra.mxu0 0.0
    %526 = vmatprep.subr.mxu0 0.0
    %527 = vmatpush1.xpose.msra.mxu0 0.0
    %528 = vmatprep.subr.mxu0 0.0
    %529 = vmatpush1.xpose.msra.mxu0 0.0
    %530 = vmatprep.subr.mxu0 0.0
    %531 = vmatpush1.xpose.msra.mxu0 0.0
    %532 = vmatprep.subr.mxu0 0.0
    %533 = vmatpush1.xpose.msra.mxu0 0.0
    %534 = vmatprep.subr.mxu0 0.0
    %535 = vmatpush1.xpose.msra.mxu0 0.0
    %536 = vmatprep.subr.mxu0 0.0
    %537 = vmatpush1.xpose.msra.mxu0 0.0
    %538 = vmatprep.subr.mxu0 0.0
    %539 = vmatpush1.xpose.msra.mxu0 0.0
    %540 = vmatprep.subr.mxu0 0.0
    %541 = vmatpush1.xpose.msra.mxu0 0.0
    %542 = vmatprep.subr.mxu0 0.0
    %543 = vmatpush1.xpose.msra.mxu0 0.0
    %544 = vmatprep.subr.mxu0 0.0
    %545 = vmatpush1.xpose.msra.mxu0 0.0
    %546 = vmatprep.subr.mxu0 0.0
    %547 = vmatpush1.xpose.msra.mxu0 0.0
    %548 = vmatprep.subr.mxu0 0.0
    %549 = vmatpush1.xpose.msra.mxu0 0.0
    %550 = vmatprep.subr.mxu0 0.0
    %551 = vmatpush1.xpose.msra.mxu0 0.0
    %552 = vmatprep.subr.mxu0 0.0
    %553 = vmatpush1.xpose.msra.mxu0 0.0
    %554 = vmatprep.subr.mxu0 0.0
    %555 = vmatpush1.xpose.msra.mxu0 0.0
    %556 = vmatprep.subr.mxu0 0.0
    %557 = vmatpush1.xpose.msra.mxu0 0.0
    %558 = vmatprep.subr.mxu0 0.0
    %559 = vmatpush1.xpose.msra.mxu0 0.0
    %560 = vmatprep.subr.mxu0 0.0
    %561 = vmatpush1.xpose.msra.mxu0 0.0
    %562 = vmatprep.subr.mxu0 0.0
    %563 = vmatpush1.xpose.msra.mxu0 0.0
    %564 = vmatprep.subr.mxu0 0.0
    %565 = vmatpush1.xpose.msra.mxu0 0.0
    %566 = vmatprep.subr.mxu0 0.0
    %567 = vmatpush1.xpose.msra.mxu0 0.0
    %568 = vmatprep.subr.mxu0 0.0
    %569 = vmatpush1.xpose.msra.mxu0 0.0
    %570 = vmatprep.subr.mxu0 0.0
    %571 = vmatpush1.xpose.msra.mxu0 0.0
    %572 = vmatprep.subr.mxu0 0.0
    %573 = vmatpush1.xpose.msra.mxu0 0.0
    %574 = vmatprep.mubr.f32.mxu0 0.0
    %575 = vmatmul.mubr.f32.gmra.mrb[0].mxu0 %v506
    %v576 = vpop.f32.mrb[0].mxu0
    %v577 = vadd.f32 0.0, %v576
    %v578 = vpop.f32.mrb[0].mxu0
    %579 = vdwg.mxu0
    %580 = vrot.lane.b32.xlu0 %v162, 120
    %v581 = vpop.permute.xlu0 %580
    %582 = vrot.lane.b32.xlu0 %v158, 88
    %v583 = vpop.permute.xlu0 %582
    %v584 = vsel %vm170, %v581, 0
    %v586 = vsel %vm170, %v583, 0
    %588 = vmatprep.subr.mxu0 0.0
    %589 = vmatpush1.xpose.msra.mxu0 %v586
    %590 = vmatprep.subr.mxu0 0.0
    %591 = vmatpush1.xpose.msra.mxu0 0.0
    %592 = vmatprep.subr.mxu0 0.0
    %593 = vmatpush1.xpose.msra.mxu0 0.0
    %594 = vmatprep.subr.mxu0 0.0
    %595 = vmatpush1.xpose.msra.mxu0 0.0
    %596 = vmatprep.subr.mxu0 0.0
    %597 = vmatpush1.xpose.msra.mxu0 0.0
    %598 = vmatprep.subr.mxu0 0.0
    %599 = vmatpush1.xpose.msra.mxu0 0.0
    %600 = vmatprep.subr.mxu0 0.0
    %601 = vmatpush1.xpose.msra.mxu0 0.0
    %602 = vmatprep.subr.mxu0 0.0
    %603 = vmatpush1.xpose.msra.mxu0 0.0
    %604 = vmatprep.subr.mxu0 0.0
    %605 = vmatpush1.xpose.msra.mxu0 0.0
    %606 = vmatprep.subr.mxu0 0.0
    %607 = vmatpush1.xpose.msra.mxu0 0.0
    %608 = vmatprep.subr.mxu0 0.0
    %609 = vmatpush1.xpose.msra.mxu0 0.0
    %610 = vmatprep.subr.mxu0 0.0
    %611 = vmatpush1.xpose.msra.mxu0 0.0
    %612 = vmatprep.subr.mxu0 0.0
    %613 = vmatpush1.xpose.msra.mxu0 0.0
    %614 = vmatprep.subr.mxu0 0.0
    %615 = vmatpush1.xpose.msra.mxu0 0.0
    %616 = vmatprep.subr.mxu0 0.0
    %617 = vmatpush1.xpose.msra.mxu0 0.0
    %618 = vmatprep.subr.mxu0 0.0
    %619 = vmatpush1.xpose.msra.mxu0 0.0
    %620 = vmatprep.subr.mxu0 0.0
    %621 = vmatpush1.xpose.msra.mxu0 0.0
    %622 = vmatprep.subr.mxu0 0.0
    %623 = vmatpush1.xpose.msra.mxu0 0.0
    %624 = vmatprep.subr.mxu0 0.0
    %625 = vmatpush1.xpose.msra.mxu0 0.0
    %626 = vmatprep.subr.mxu0 0.0
    %627 = vmatpush1.xpose.msra.mxu0 0.0
    %628 = vmatprep.subr.mxu0 0.0
    %629 = vmatpush1.xpose.msra.mxu0 0.0
    %630 = vmatprep.subr.mxu0 0.0
    %631 = vmatpush1.xpose.msra.mxu0 0.0
    %632 = vmatprep.subr.mxu0 0.0
    %633 = vmatpush1.xpose.msra.mxu0 0.0
    %634 = vmatprep.subr.mxu0 0.0
    %635 = vmatpush1.xpose.msra.mxu0 0.0
    %636 = vmatprep.subr.mxu0 0.0
    %637 = vmatpush1.xpose.msra.mxu0 0.0
    %638 = vmatprep.subr.mxu0 0.0
    %639 = vmatpush1.xpose.msra.mxu0 0.0
    %640 = vmatprep.subr.mxu0 0.0
    %641 = vmatpush1.xpose.msra.mxu0 0.0
    %642 = vmatprep.subr.mxu0 0.0
    %643 = vmatpush1.xpose.msra.mxu0 0.0
    %644 = vmatprep.subr.mxu0 0.0
    %645 = vmatpush1.xpose.msra.mxu0 0.0
    %646 = vmatprep.subr.mxu0 0.0
    %647 = vmatpush1.xpose.msra.mxu0 0.0
    %648 = vmatprep.subr.mxu0 0.0
    %649 = vmatpush1.xpose.msra.mxu0 0.0
    %650 = vmatprep.subr.mxu0 0.0
    %651 = vmatpush1.xpose.msra.mxu0 0.0
    %652 = vmatprep.mubr.f32.mxu0 0.0
    %653 = vmatmul.mubr.f32.gmra.mrb[0].mxu0 %v584
    %v654 = vpop.f32.mrb[0].mxu0
    %v655 = vadd.f32 0.0, %v654
    %v656 = vpop.f32.mrb[0].mxu0
    %657 = vdwg.mxu0
    %v658 = vsel %vm324, -1e+09, %v577
    %v659 = vsel %vm325, -1e+09, %v655
    %v660 = vsel %vm170, %v658, -inf
    %661 = vmax.xlane.f32.xlu0 %v660
    %v662 = vpop.xlane.xlu0 %661
    %v663 = vsel %vm170, %v659, -inf
    %664 = vmax.xlane.f32.xlu0 %v663
    %v665 = vpop.xlane.xlu0 %664
    %v666 = vsub.f32 %v658, %v662
    %v667 = vsub.f32 %v659, %v665
    %v668 = vmul.f32 %v666, 1.442695
    %v669 = vpow.pop %v668
    %v670 = vmul.f32 %v667, 1.442695
    %v671 = vpow.pop %v670
    %v672 = vsel %vm170, %v669, 0.0
    %673 = vadd.xlane.f32.xlu0 %v672
    %v674 = vpop.xlane.xlu0 %673
    %v675 = vsel %vm170, %v671, 0.0
    %676 = vadd.xlane.f32.xlu0 %v675
    %v677 = vpop.xlane.xlu0 %676
    %v678 = vrcp.pop %v674
    %v679 = vrcp.pop %v677
    %v680 = vmul.f32 %v669, %v678
    %v681 = vmul.f32 %v671, %v679
    %682 = vrot.lane.b32.xlu0 %v153, 56
    %v683 = vpop.permute.xlu0 %682
    %v686 = vsel %vm170, %v680, 0
    %688 = vmatprep.subr.mxu0 0.0
    %689 = vmatpush1.msra.mxu0 %v683
    %690 = vmatprep.subr.mxu0 0.0
    %691 = vmatpush1.msra.mxu0 0.0
    %692 = vmatprep.subr.mxu0 0.0
    %693 = vmatpush1.msra.mxu0 0.0
    %694 = vmatprep.subr.mxu0 0.0
    %695 = vmatpush1.msra.mxu0 0.0
    %696 = vmatprep.subr.mxu0 0.0
    %697 = vmatpush1.msra.mxu0 0.0
    %698 = vmatprep.subr.mxu0 0.0
    %699 = vmatpush1.msra.mxu0 0.0
    %700 = vmatprep.subr.mxu0 0.0
    %701 = vmatpush1.msra.mxu0 0.0
    %702 = vmatprep.subr.mxu0 0.0
    %703 = vmatpush1.msra.mxu0 0.0
    %704 = vmatprep.subr.mxu0 0.0
    %705 = vmatpush1.msra.mxu0 0.0
    %706 = vmatprep.subr.mxu0 0.0
    %707 = vmatpush1.msra.mxu0 0.0
    %708 = vmatprep.subr.mxu0 0.0
    %709 = vmatpush1.msra.mxu0 0.0
    %710 = vmatprep.subr.mxu0 0.0
    %711 = vmatpush1.msra.mxu0 0.0
    %712 = vmatprep.subr.mxu0 0.0
    %713 = vmatpush1.msra.mxu0 0.0
    %714 = vmatprep.subr.mxu0 0.0
    %715 = vmatpush1.msra.mxu0 0.0
    %716 = vmatprep.subr.mxu0 0.0
    %717 = vmatpush1.msra.mxu0 0.0
    %718 = vmatprep.subr.mxu0 0.0
    %719 = vmatpush1.msra.mxu0 0.0
    %720 = vmatprep.subr.mxu0 0.0
    %721 = vmatpush1.msra.mxu0 0.0
    %722 = vmatprep.subr.mxu0 0.0
    %723 = vmatpush1.msra.mxu0 0.0
    %724 = vmatprep.subr.mxu0 0.0
    %725 = vmatpush1.msra.mxu0 0.0
    %726 = vmatprep.subr.mxu0 0.0
    %727 = vmatpush1.msra.mxu0 0.0
    %728 = vmatprep.subr.mxu0 0.0
    %729 = vmatpush1.msra.mxu0 0.0
    %730 = vmatprep.subr.mxu0 0.0
    %731 = vmatpush1.msra.mxu0 0.0
    %732 = vmatprep.subr.mxu0 0.0
    %733 = vmatpush1.msra.mxu0 0.0
    %734 = vmatprep.subr.mxu0 0.0
    %735 = vmatpush1.msra.mxu0 0.0
    %736 = vmatprep.subr.mxu0 0.0
    %737 = vmatpush1.msra.mxu0 0.0
    %738 = vmatprep.subr.mxu0 0.0
    %739 = vmatpush1.msra.mxu0 0.0
    %740 = vmatprep.subr.mxu0 0.0
    %741 = vmatpush1.msra.mxu0 0.0
    %742 = vmatprep.subr.mxu0 0.0
    %743 = vmatpush1.msra.mxu0 0.0
    %744 = vmatprep.subr.mxu0 0.0
    %745 = vmatpush1.msra.mxu0 0.0
    %746 = vmatprep.subr.mxu0 0.0
    %747 = vmatpush1.msra.mxu0 0.0
    %748 = vmatprep.subr.mxu0 0.0
    %749 = vmatpush1.msra.mxu0 0.0
    %750 = vmatprep.subr.mxu0 0.0
    %751 = vmatpush1.msra.mxu0 0.0
    %752 = vmatprep.mubr.f32.mxu0 0.0
    %753 = vmatmul.mubr.f32.gmra.mrb[0].mxu0 %v686
    %v754 = vpop.f32.mrb[0].mxu0
    %v755 = vadd.f32 0.0, %v754
    %v756 = vpop.f32.mrb[0].mxu0
    %757 = vdwg.mxu0
    %758 = vrot.lane.b32.xlu0 %v158, 56
    %v759 = vpop.permute.xlu0 %758
    %v762 = vsel %vm170, %v681, 0
    %764 = vmatprep.subr.mxu0 0.0
    %765 = vmatpush1.msra.mxu0 %v759
    %766 = vmatprep.subr.mxu0 0.0
    %767 = vmatpush1.msra.mxu0 0.0
    %768 = vmatprep.subr.mxu0 0.0
    %769 = vmatpush1.msra.mxu0 0.0
    %770 = vmatprep.subr.mxu0 0.0
    %771 = vmatpush1.msra.mxu0 0.0
    %772 = vmatprep.subr.mxu0 0.0
    %773 = vmatpush1.msra.mxu0 0.0
    %774 = vmatprep.subr.mxu0 0.0
    %775 = vmatpush1.msra.mxu0 0.0
    %776 = vmatprep.subr.mxu0 0.0
    %777 = vmatpush1.msra.mxu0 0.0
    %778 = vmatprep.subr.mxu0 0.0
    %779 = vmatpush1.msra.mxu0 0.0
    %780 = vmatprep.subr.mxu0 0.0
    %781 = vmatpush1.msra.mxu0 0.0
    %782 = vmatprep.subr.mxu0 0.0
    %783 = vmatpush1.msra.mxu0 0.0
    %784 = vmatprep.subr.mxu0 0.0
    %785 = vmatpush1.msra.mxu0 0.0
    %786 = vmatprep.subr.mxu0 0.0
    %787 = vmatpush1.msra.mxu0 0.0
    %788 = vmatprep.subr.mxu0 0.0
    %789 = vmatpush1.msra.mxu0 0.0
    %790 = vmatprep.subr.mxu0 0.0
    %791 = vmatpush1.msra.mxu0 0.0
    %792 = vmatprep.subr.mxu0 0.0
    %793 = vmatpush1.msra.mxu0 0.0
    %794 = vmatprep.subr.mxu0 0.0
    %795 = vmatpush1.msra.mxu0 0.0
    %796 = vmatprep.subr.mxu0 0.0
    %797 = vmatpush1.msra.mxu0 0.0
    %798 = vmatprep.subr.mxu0 0.0
    %799 = vmatpush1.msra.mxu0 0.0
    %800 = vmatprep.subr.mxu0 0.0
    %801 = vmatpush1.msra.mxu0 0.0
    %802 = vmatprep.subr.mxu0 0.0
    %803 = vmatpush1.msra.mxu0 0.0
    %804 = vmatprep.subr.mxu0 0.0
    %805 = vmatpush1.msra.mxu0 0.0
    %806 = vmatprep.subr.mxu0 0.0
    %807 = vmatpush1.msra.mxu0 0.0
    %808 = vmatprep.subr.mxu0 0.0
    %809 = vmatpush1.msra.mxu0 0.0
    %810 = vmatprep.subr.mxu0 0.0
    %811 = vmatpush1.msra.mxu0 0.0
    %812 = vmatprep.subr.mxu0 0.0
    %813 = vmatpush1.msra.mxu0 0.0
    %814 = vmatprep.subr.mxu0 0.0
    %815 = vmatpush1.msra.mxu0 0.0
    %816 = vmatprep.subr.mxu0 0.0
    %817 = vmatpush1.msra.mxu0 0.0
    %818 = vmatprep.subr.mxu0 0.0
    %819 = vmatpush1.msra.mxu0 0.0
    %820 = vmatprep.subr.mxu0 0.0
    %821 = vmatpush1.msra.mxu0 0.0
    %822 = vmatprep.subr.mxu0 0.0
    %823 = vmatpush1.msra.mxu0 0.0
    %824 = vmatprep.subr.mxu0 0.0
    %825 = vmatpush1.msra.mxu0 0.0
    %826 = vmatprep.subr.mxu0 0.0
    %827 = vmatpush1.msra.mxu0 0.0
    %828 = vmatprep.mubr.f32.mxu0 0.0
    %829 = vmatmul.mubr.f32.gmra.mrb[0].mxu0 %v762
    %v830 = vpop.f32.mrb[0].mxu0
    %v831 = vadd.f32 0.0, %v830
    %v832 = vpop.f32.mrb[0].mxu0
    %833 = vdwg.mxu0
    %v835 = vsel %vm170, %v755, 0
    %v838 = vsel %vm170, %v831, 0
    %840 = vmatprep.subr.mxu0 0.0
    %841 = vmatpush1.msra.mxu0 %v164
    %842 = vmatprep.subr.mxu0 0.0
    %843 = vmatpush1.msra.mxu0 0.0
    %844 = vmatprep.subr.mxu0 0.0
    %845 = vmatpush1.msra.mxu0 0.0
    %846 = vmatprep.subr.mxu0 0.0
    %847 = vmatpush1.msra.mxu0 0.0
    %848 = vmatprep.subr.mxu0 0.0
    %849 = vmatpush1.msra.mxu0 0.0
    %850 = vmatprep.subr.mxu0 0.0
    %851 = vmatpush1.msra.mxu0 0.0
    %852 = vmatprep.subr.mxu0 0.0
    %853 = vmatpush1.msra.mxu0 0.0
    %854 = vmatprep.subr.mxu0 0.0
    %855 = vmatpush1.msra.mxu0 0.0
    %856 = vmatprep.subr.mxu0 0.0
    %857 = vmatpush1.msra.mxu0 0.0
    %858 = vmatprep.subr.mxu0 0.0
    %859 = vmatpush1.msra.mxu0 0.0
    %860 = vmatprep.subr.mxu0 0.0
    %861 = vmatpush1.msra.mxu0 0.0
    %862 = vmatprep.subr.mxu0 0.0
    %863 = vmatpush1.msra.mxu0 0.0
    %864 = vmatprep.subr.mxu0 0.0
    %865 = vmatpush1.msra.mxu0 0.0
    %866 = vmatprep.subr.mxu0 0.0
    %867 = vmatpush1.msra.mxu0 0.0
    %868 = vmatprep.subr.mxu0 0.0
    %869 = vmatpush1.msra.mxu0 0.0
    %870 = vmatprep.subr.mxu0 0.0
    %871 = vmatpush1.msra.mxu0 0.0
    %872 = vmatprep.subr.mxu0 0.0
    %873 = vmatpush1.msra.mxu0 0.0
    %874 = vmatprep.subr.mxu0 0.0
    %875 = vmatpush1.msra.mxu0 0.0
    %876 = vmatprep.subr.mxu0 0.0
    %877 = vmatpush1.msra.mxu0 0.0
    %878 = vmatprep.subr.mxu0 0.0
    %879 = vmatpush1.msra.mxu0 0.0
    %880 = vmatprep.subr.mxu0 0.0
    %881 = vmatpush1.msra.mxu0 0.0
    %882 = vmatprep.subr.mxu0 0.0
    %883 = vmatpush1.msra.mxu0 0.0
    %884 = vmatprep.subr.mxu0 0.0
    %885 = vmatpush1.msra.mxu0 0.0
    %886 = vmatprep.subr.mxu0 0.0
    %887 = vmatpush1.msra.mxu0 0.0
    %888 = vmatprep.subr.mxu0 0.0
    %889 = vmatpush1.msra.mxu0 0.0
    %890 = vmatprep.subr.mxu0 0.0
    %891 = vmatpush1.msra.mxu0 0.0
    %892 = vmatprep.subr.mxu0 0.0
    %893 = vmatpush1.msra.mxu0 0.0
    %894 = vmatprep.subr.mxu0 0.0
    %895 = vmatpush1.msra.mxu0 0.0
    %896 = vmatprep.subr.mxu0 0.0
    %897 = vmatpush1.msra.mxu0 0.0
    %898 = vmatprep.subr.mxu0 0.0
    %899 = vmatpush1.msra.mxu0 0.0
    %900 = vmatprep.subr.mxu0 0.0
    %901 = vmatpush1.msra.mxu0 0.0
    %902 = vmatprep.subr.mxu0 0.0
    %903 = vmatpush1.msra.mxu0 0.0
    %904 = vmatprep.mubr.f32.mxu0 0.0
    %905 = vmatmul.mubr.f32.gmra.mrb[0].mxu0 %v835
    %v906 = vpop.f32.mrb[0].mxu0
    %v907 = vadd.f32 0.0, %v906
    %v908 = vpop.f32.mrb[0].mxu0
    %909 = vmatprep.mubr.f32.mxu0 0.0
    %910 = vmatmul.mubr.f32.gmra.mrb[0].mxu0 %v838
    %v911 = vpop.f32.mrb[0].mxu0
    %v912 = vadd.f32 0.0, %v911
    %v913 = vpop.f32.mrb[0].mxu0
    %914 = vdwg.mxu0
    %v916 = vsel %vm170, %v423, 0
    %v919 = vsel %vm170, %v499, 0
    %921 = vmatprep.subr.mxu0 0.0
    %922 = vmatpush1.msra.mxu0 %v163
    %923 = vmatprep.subr.mxu0 0.0
    %924 = vmatpush1.msra.mxu0 0.0
    %925 = vmatprep.subr.mxu0 0.0
    %926 = vmatpush1.msra.mxu0 0.0
    %927 = vmatprep.subr.mxu0 0.0
    %928 = vmatpush1.msra.mxu0 0.0
    %929 = vmatprep.subr.mxu0 0.0
    %930 = vmatpush1.msra.mxu0 0.0
    %931 = vmatprep.subr.mxu0 0.0
    %932 = vmatpush1.msra.mxu0 0.0
    %933 = vmatprep.subr.mxu0 0.0
    %934 = vmatpush1.msra.mxu0 0.0
    %935 = vmatprep.subr.mxu0 0.0
    %936 = vmatpush1.msra.mxu0 0.0
    %937 = vmatprep.subr.mxu0 0.0
    %938 = vmatpush1.msra.mxu0 0.0
    %939 = vmatprep.subr.mxu0 0.0
    %940 = vmatpush1.msra.mxu0 0.0
    %941 = vmatprep.subr.mxu0 0.0
    %942 = vmatpush1.msra.mxu0 0.0
    %943 = vmatprep.subr.mxu0 0.0
    %944 = vmatpush1.msra.mxu0 0.0
    %945 = vmatprep.subr.mxu0 0.0
    %946 = vmatpush1.msra.mxu0 0.0
    %947 = vmatprep.subr.mxu0 0.0
    %948 = vmatpush1.msra.mxu0 0.0
    %949 = vmatprep.subr.mxu0 0.0
    %950 = vmatpush1.msra.mxu0 0.0
    %951 = vmatprep.subr.mxu0 0.0
    %952 = vmatpush1.msra.mxu0 0.0
    %953 = vmatprep.subr.mxu0 0.0
    %954 = vmatpush1.msra.mxu0 0.0
    %955 = vmatprep.subr.mxu0 0.0
    %956 = vmatpush1.msra.mxu0 0.0
    %957 = vmatprep.subr.mxu0 0.0
    %958 = vmatpush1.msra.mxu0 0.0
    %959 = vmatprep.subr.mxu0 0.0
    %960 = vmatpush1.msra.mxu0 0.0
    %961 = vmatprep.subr.mxu0 0.0
    %962 = vmatpush1.msra.mxu0 0.0
    %963 = vmatprep.subr.mxu0 0.0
    %964 = vmatpush1.msra.mxu0 0.0
    %965 = vmatprep.subr.mxu0 0.0
    %966 = vmatpush1.msra.mxu0 0.0
    %967 = vmatprep.subr.mxu0 0.0
    %968 = vmatpush1.msra.mxu0 0.0
    %969 = vmatprep.subr.mxu0 0.0
    %970 = vmatpush1.msra.mxu0 0.0
    %971 = vmatprep.subr.mxu0 0.0
    %972 = vmatpush1.msra.mxu0 0.0
    %973 = vmatprep.subr.mxu0 0.0
    %974 = vmatpush1.msra.mxu0 0.0
    %975 = vmatprep.subr.mxu0 0.0
    %976 = vmatpush1.msra.mxu0 0.0
    %977 = vmatprep.subr.mxu0 0.0
    %978 = vmatpush1.msra.mxu0 0.0
    %979 = vmatprep.subr.mxu0 0.0
    %980 = vmatpush1.msra.mxu0 0.0
    %981 = vmatprep.subr.mxu0 0.0
    %982 = vmatpush1.msra.mxu0 0.0
    %983 = vmatprep.subr.mxu0 0.0
    %984 = vmatpush1.msra.mxu0 0.0
    %985 = vmatprep.mubr.f32.mxu0 0.0
    %986 = vmatmul.mubr.f32.gmra.mrb[0].mxu0 %v916
    %v987 = vpop.f32.mrb[0].mxu0
    %v988 = vadd.f32 %v907, %v987
    %v989 = vpop.f32.mrb[0].mxu0
    %990 = vmatprep.mubr.f32.mxu0 0.0
    %991 = vmatmul.mubr.f32.gmra.mrb[0].mxu0 %v919
    %v992 = vpop.f32.mrb[0].mxu0
    %v993 = vadd.f32 %v912, %v992
    %v994 = vpop.f32.mrb[0].mxu0
    %995 = vdwg.mxu0
    %996 = vrot.lane.b32.xlu0 %v161, 112
    %v997 = vpop.permute.xlu0 %996
    %998 = vrot.lane.b32.xlu0 %v153, 80
    %v999 = vpop.permute.xlu0 %998
    %v1000 = vsel %vm170, %v997, 0
    %v1002 = vsel %vm170, %v999, 0
    %1004 = vmatprep.subr.mxu0 0.0
    %1005 = vmatpush1.xpose.msra.mxu0 %v1002
    %1006 = vmatprep.subr.mxu0 0.0
    %1007 = vmatpush1.xpose.msra.mxu0 0.0
    %1008 = vmatprep.subr.mxu0 0.0
    %1009 = vmatpush1.xpose.msra.mxu0 0.0
    %1010 = vmatprep.subr.mxu0 0.0
    %1011 = vmatpush1.xpose.msra.mxu0 0.0
    %1012 = vmatprep.subr.mxu0 0.0
    %1013 = vmatpush1.xpose.msra.mxu0 0.0
    %1014 = vmatprep.subr.mxu0 0.0
    %1015 = vmatpush1.xpose.msra.mxu0 0.0
    %1016 = vmatprep.subr.mxu0 0.0
    %1017 = vmatpush1.xpose.msra.mxu0 0.0
    %1018 = vmatprep.subr.mxu0 0.0
    %1019 = vmatpush1.xpose.msra.mxu0 0.0
    %1020 = vmatprep.subr.mxu0 0.0
    %1021 = vmatpush1.xpose.msra.mxu0 0.0
    %1022 = vmatprep.subr.mxu0 0.0
    %1023 = vmatpush1.xpose.msra.mxu0 0.0
    %1024 = vmatprep.subr.mxu0 0.0
    %1025 = vmatpush1.xpose.msra.mxu0 0.0
    %1026 = vmatprep.subr.mxu0 0.0
    %1027 = vmatpush1.xpose.msra.mxu0 0.0
    %1028 = vmatprep.subr.mxu0 0.0
    %1029 = vmatpush1.xpose.msra.mxu0 0.0
    %1030 = vmatprep.subr.mxu0 0.0
    %1031 = vmatpush1.xpose.msra.mxu0 0.0
    %1032 = vmatprep.subr.mxu0 0.0
    %1033 = vmatpush1.xpose.msra.mxu0 0.0
    %1034 = vmatprep.subr.mxu0 0.0
    %1035 = vmatpush1.xpose.msra.mxu0 0.0
    %1036 = vmatprep.subr.mxu0 0.0
    %1037 = vmatpush1.xpose.msra.mxu0 0.0
    %1038 = vmatprep.subr.mxu0 0.0
    %1039 = vmatpush1.xpose.msra.mxu0 0.0
    %1040 = vmatprep.subr.mxu0 0.0
    %1041 = vmatpush1.xpose.msra.mxu0 0.0
    %1042 = vmatprep.subr.mxu0 0.0
    %1043 = vmatpush1.xpose.msra.mxu0 0.0
    %1044 = vmatprep.subr.mxu0 0.0
    %1045 = vmatpush1.xpose.msra.mxu0 0.0
    %1046 = vmatprep.subr.mxu0 0.0
    %1047 = vmatpush1.xpose.msra.mxu0 0.0
    %1048 = vmatprep.subr.mxu0 0.0
    %1049 = vmatpush1.xpose.msra.mxu0 0.0
    %1050 = vmatprep.subr.mxu0 0.0
    %1051 = vmatpush1.xpose.msra.mxu0 0.0
    %1052 = vmatprep.subr.mxu0 0.0
    %1053 = vmatpush1.xpose.msra.mxu0 0.0
    %1054 = vmatprep.subr.mxu0 0.0
    %1055 = vmatpush1.xpose.msra.mxu0 0.0
    %1056 = vmatprep.subr.mxu0 0.0
    %1057 = vmatpush1.xpose.msra.mxu0 0.0
    %1058 = vmatprep.subr.mxu0 0.0
    %1059 = vmatpush1.xpose.msra.mxu0 0.0
    %1060 = vmatprep.subr.mxu0 0.0
    %1061 = vmatpush1.xpose.msra.mxu0 0.0
    %1062 = vmatprep.subr.mxu0 0.0
    %1063 = vmatpush1.xpose.msra.mxu0 0.0
    %1064 = vmatprep.subr.mxu0 0.0
    %1065 = vmatpush1.xpose.msra.mxu0 0.0
    %1066 = vmatprep.subr.mxu0 0.0
    %1067 = vmatpush1.xpose.msra.mxu0 0.0
    %1068 = vmatprep.mubr.f32.mxu0 0.0
    %1069 = vmatmul.mubr.f32.gmra.mrb[0].mxu0 %v1000
    %v1070 = vpop.f32.mrb[0].mxu0
    %v1071 = vadd.f32 0.0, %v1070
    %v1072 = vpop.f32.mrb[0].mxu0
    %1073 = vdwg.mxu0
    %1074 = vrot.lane.b32.xlu0 %v162, 112
    %v1075 = vpop.permute.xlu0 %1074
    %1076 = vrot.lane.b32.xlu0 %v158, 80
    %v1077 = vpop.permute.xlu0 %1076
    %v1078 = vsel %vm170, %v1075, 0
    %v1080 = vsel %vm170, %v1077, 0
    %1082 = vmatprep.subr.mxu0 0.0
    %1083 = vmatpush1.xpose.msra.mxu0 %v1080
    %1084 = vmatprep.subr.mxu0 0.0
    %1085 = vmatpush1.xpose.msra.mxu0 0.0
    %1086 = vmatprep.subr.mxu0 0.0
    %1087 = vmatpush1.xpose.msra.mxu0 0.0
    %1088 = vmatprep.subr.mxu0 0.0
    %1089 = vmatpush1.xpose.msra.mxu0 0.0
    %1090 = vmatprep.subr.mxu0 0.0
    %1091 = vmatpush1.xpose.msra.mxu0 0.0
    %1092 = vmatprep.subr.mxu0 0.0
    %1093 = vmatpush1.xpose.msra.mxu0 0.0
    %1094 = vmatprep.subr.mxu0 0.0
    %1095 = vmatpush1.xpose.msra.mxu0 0.0
    %1096 = vmatprep.subr.mxu0 0.0
    %1097 = vmatpush1.xpose.msra.mxu0 0.0
    %1098 = vmatprep.subr.mxu0 0.0
    %1099 = vmatpush1.xpose.msra.mxu0 0.0
    %1100 = vmatprep.subr.mxu0 0.0
    %1101 = vmatpush1.xpose.msra.mxu0 0.0
    %1102 = vmatprep.subr.mxu0 0.0
    %1103 = vmatpush1.xpose.msra.mxu0 0.0
    %1104 = vmatprep.subr.mxu0 0.0
    %1105 = vmatpush1.xpose.msra.mxu0 0.0
    %1106 = vmatprep.subr.mxu0 0.0
    %1107 = vmatpush1.xpose.msra.mxu0 0.0
    %1108 = vmatprep.subr.mxu0 0.0
    %1109 = vmatpush1.xpose.msra.mxu0 0.0
    %1110 = vmatprep.subr.mxu0 0.0
    %1111 = vmatpush1.xpose.msra.mxu0 0.0
    %1112 = vmatprep.subr.mxu0 0.0
    %1113 = vmatpush1.xpose.msra.mxu0 0.0
    %1114 = vmatprep.subr.mxu0 0.0
    %1115 = vmatpush1.xpose.msra.mxu0 0.0
    %1116 = vmatprep.subr.mxu0 0.0
    %1117 = vmatpush1.xpose.msra.mxu0 0.0
    %1118 = vmatprep.subr.mxu0 0.0
    %1119 = vmatpush1.xpose.msra.mxu0 0.0
    %1120 = vmatprep.subr.mxu0 0.0
    %1121 = vmatpush1.xpose.msra.mxu0 0.0
    %1122 = vmatprep.subr.mxu0 0.0
    %1123 = vmatpush1.xpose.msra.mxu0 0.0
    %1124 = vmatprep.subr.mxu0 0.0
    %1125 = vmatpush1.xpose.msra.mxu0 0.0
    %1126 = vmatprep.subr.mxu0 0.0
    %1127 = vmatpush1.xpose.msra.mxu0 0.0
    %1128 = vmatprep.subr.mxu0 0.0
    %1129 = vmatpush1.xpose.msra.mxu0 0.0
    %1130 = vmatprep.subr.mxu0 0.0
    %1131 = vmatpush1.xpose.msra.mxu0 0.0
    %1132 = vmatprep.subr.mxu0 0.0
    %1133 = vmatpush1.xpose.msra.mxu0 0.0
    %1134 = vmatprep.subr.mxu0 0.0
    %1135 = vmatpush1.xpose.msra.mxu0 0.0
    %1136 = vmatprep.subr.mxu0 0.0
    %1137 = vmatpush1.xpose.msra.mxu0 0.0
    %1138 = vmatprep.subr.mxu0 0.0
    %1139 = vmatpush1.xpose.msra.mxu0 0.0
    %1140 = vmatprep.subr.mxu0 0.0
    %1141 = vmatpush1.xpose.msra.mxu0 0.0
    %1142 = vmatprep.subr.mxu0 0.0
    %1143 = vmatpush1.xpose.msra.mxu0 0.0
    %1144 = vmatprep.subr.mxu0 0.0
    %1145 = vmatpush1.xpose.msra.mxu0 0.0
    %1146 = vmatprep.mubr.f32.mxu0 0.0
    %1147 = vmatmul.mubr.f32.gmra.mrb[0].mxu0 %v1078
    %v1148 = vpop.f32.mrb[0].mxu0
    %v1149 = vadd.f32 0.0, %v1148
    %v1150 = vpop.f32.mrb[0].mxu0
    %1151 = vdwg.mxu0
    %v1152 = vsel %vm324, -1e+09, %v1071
    %v1153 = vsel %vm325, -1e+09, %v1149
    %v1154 = vsel %vm170, %v1152, -inf
    %1155 = vmax.xlane.f32.xlu0 %v1154
    %v1156 = vpop.xlane.xlu0 %1155
    %v1157 = vsel %vm170, %v1153, -inf
    %1158 = vmax.xlane.f32.xlu0 %v1157
    %v1159 = vpop.xlane.xlu0 %1158
    %v1160 = vsub.f32 %v1152, %v1156
    %v1161 = vsub.f32 %v1153, %v1159
    %v1162 = vmul.f32 %v1160, 1.442695
    %v1163 = vpow.pop %v1162
    %v1164 = vmul.f32 %v1161, 1.442695
    %v1165 = vpow.pop %v1164
    %v1166 = vsel %vm170, %v1163, 0.0
    %1167 = vadd.xlane.f32.xlu0 %v1166
    %v1168 = vpop.xlane.xlu0 %1167
    %v1169 = vsel %vm170, %v1165, 0.0
    %1170 = vadd.xlane.f32.xlu0 %v1169
    %v1171 = vpop.xlane.xlu0 %1170
    %v1172 = vrcp.pop %v1168
    %v1173 = vrcp.pop %v1171
    %v1174 = vmul.f32 %v1163, %v1172
    %v1175 = vmul.f32 %v1165, %v1173
    %1176 = vrot.lane.b32.xlu0 %v153, 48
    %v1177 = vpop.permute.xlu0 %1176
    %v1180 = vsel %vm170, %v1174, 0
    %1182 = vmatprep.subr.mxu0 0.0
    %1183 = vmatpush1.msra.mxu0 %v1177
    %1184 = vmatprep.subr.mxu0 0.0
    %1185 = vmatpush1.msra.mxu0 0.0
    %1186 = vmatprep.subr.mxu0 0.0
    %1187 = vmatpush1.msra.mxu0 0.0
    %1188 = vmatprep.subr.mxu0 0.0
    %1189 = vmatpush1.msra.mxu0 0.0
    %1190 = vmatprep.subr.mxu0 0.0
    %1191 = vmatpush1.msra.mxu0 0.0
    %1192 = vmatprep.subr.mxu0 0.0
    %1193 = vmatpush1.msra.mxu0 0.0
    %1194 = vmatprep.subr.mxu0 0.0
    %1195 = vmatpush1.msra.mxu0 0.0
    %1196 = vmatprep.subr.mxu0 0.0
    %1197 = vmatpush1.msra.mxu0 0.0
    %1198 = vmatprep.subr.mxu0 0.0
    %1199 = vmatpush1.msra.mxu0 0.0
    %1200 = vmatprep.subr.mxu0 0.0
    %1201 = vmatpush1.msra.mxu0 0.0
    %1202 = vmatprep.subr.mxu0 0.0
    %1203 = vmatpush1.msra.mxu0 0.0
    %1204 = vmatprep.subr.mxu0 0.0
    %1205 = vmatpush1.msra.mxu0 0.0
    %1206 = vmatprep.subr.mxu0 0.0
    %1207 = vmatpush1.msra.mxu0 0.0
    %1208 = vmatprep.subr.mxu0 0.0
    %1209 = vmatpush1.msra.mxu0 0.0
    %1210 = vmatprep.subr.mxu0 0.0
    %1211 = vmatpush1.msra.mxu0 0.0
    %1212 = vmatprep.subr.mxu0 0.0
    %1213 = vmatpush1.msra.mxu0 0.0
    %1214 = vmatprep.subr.mxu0 0.0
    %1215 = vmatpush1.msra.mxu0 0.0
    %1216 = vmatprep.subr.mxu0 0.0
    %1217 = vmatpush1.msra.mxu0 0.0
    %1218 = vmatprep.subr.mxu0 0.0
    %1219 = vmatpush1.msra.mxu0 0.0
    %1220 = vmatprep.subr.mxu0 0.0
    %1221 = vmatpush1.msra.mxu0 0.0
    %1222 = vmatprep.subr.mxu0 0.0
    %1223 = vmatpush1.msra.mxu0 0.0
    %1224 = vmatprep.subr.mxu0 0.0
    %1225 = vmatpush1.msra.mxu0 0.0
    %1226 = vmatprep.subr.mxu0 0.0
    %1227 = vmatpush1.msra.mxu0 0.0
    %1228 = vmatprep.subr.mxu0 0.0
    %1229 = vmatpush1.msra.mxu0 0.0
    %1230 = vmatprep.subr.mxu0 0.0
    %1231 = vmatpush1.msra.mxu0 0.0
    %1232 = vmatprep.subr.mxu0 0.0
    %1233 = vmatpush1.msra.mxu0 0.0
    %1234 = vmatprep.subr.mxu0 0.0
    %1235 = vmatpush1.msra.mxu0 0.0
    %1236 = vmatprep.subr.mxu0 0.0
    %1237 = vmatpush1.msra.mxu0 0.0
    %1238 = vmatprep.subr.mxu0 0.0
    %1239 = vmatpush1.msra.mxu0 0.0
    %1240 = vmatprep.subr.mxu0 0.0
    %1241 = vmatpush1.msra.mxu0 0.0
    %1242 = vmatprep.subr.mxu0 0.0
    %1243 = vmatpush1.msra.mxu0 0.0
    %1244 = vmatprep.subr.mxu0 0.0
    %1245 = vmatpush1.msra.mxu0 0.0
    %1246 = vmatprep.mubr.f32.mxu0 0.0
    %1247 = vmatmul.mubr.f32.gmra.mrb[0].mxu0 %v1180
    %v1248 = vpop.f32.mrb[0].mxu0
    %v1249 = vadd.f32 0.0, %v1248
    %v1250 = vpop.f32.mrb[0].mxu0
    %1251 = vdwg.mxu0
    %1252 = vrot.lane.b32.xlu0 %v158, 48
    %v1253 = vpop.permute.xlu0 %1252
    %v1256 = vsel %vm170, %v1175, 0
    %1258 = vmatprep.subr.mxu0 0.0
    %1259 = vmatpush1.msra.mxu0 %v1253
    %1260 = vmatprep.subr.mxu0 0.0
    %1261 = vmatpush1.msra.mxu0 0.0
    %1262 = vmatprep.subr.mxu0 0.0
    %1263 = vmatpush1.msra.mxu0 0.0
    %1264 = vmatprep.subr.mxu0 0.0
    %1265 = vmatpush1.msra.mxu0 0.0
    %1266 = vmatprep.subr.mxu0 0.0
    %1267 = vmatpush1.msra.mxu0 0.0
    %1268 = vmatprep.subr.mxu0 0.0
    %1269 = vmatpush1.msra.mxu0 0.0
    %1270 = vmatprep.subr.mxu0 0.0
    %1271 = vmatpush1.msra.mxu0 0.0
    %1272 = vmatprep.subr.mxu0 0.0
    %1273 = vmatpush1.msra.mxu0 0.0
    %1274 = vmatprep.subr.mxu0 0.0
    %1275 = vmatpush1.msra.mxu0 0.0
    %1276 = vmatprep.subr.mxu0 0.0
    %1277 = vmatpush1.msra.mxu0 0.0
    %1278 = vmatprep.subr.mxu0 0.0
    %1279 = vmatpush1.msra.mxu0 0.0
    %1280 = vmatprep.subr.mxu0 0.0
    %1281 = vmatpush1.msra.mxu0 0.0
    %1282 = vmatprep.subr.mxu0 0.0
    %1283 = vmatpush1.msra.mxu0 0.0
    %1284 = vmatprep.subr.mxu0 0.0
    %1285 = vmatpush1.msra.mxu0 0.0
    %1286 = vmatprep.subr.mxu0 0.0
    %1287 = vmatpush1.msra.mxu0 0.0
    %1288 = vmatprep.subr.mxu0 0.0
    %1289 = vmatpush1.msra.mxu0 0.0
    %1290 = vmatprep.subr.mxu0 0.0
    %1291 = vmatpush1.msra.mxu0 0.0
    %1292 = vmatprep.subr.mxu0 0.0
    %1293 = vmatpush1.msra.mxu0 0.0
    %1294 = vmatprep.subr.mxu0 0.0
    %1295 = vmatpush1.msra.mxu0 0.0
    %1296 = vmatprep.subr.mxu0 0.0
    %1297 = vmatpush1.msra.mxu0 0.0
    %1298 = vmatprep.subr.mxu0 0.0
    %1299 = vmatpush1.msra.mxu0 0.0
    %1300 = vmatprep.subr.mxu0 0.0
    %1301 = vmatpush1.msra.mxu0 0.0
    %1302 = vmatprep.subr.mxu0 0.0
    %1303 = vmatpush1.msra.mxu0 0.0
    %1304 = vmatprep.subr.mxu0 0.0
    %1305 = vmatpush1.msra.mxu0 0.0
    %1306 = vmatprep.subr.mxu0 0.0
    %1307 = vmatpush1.msra.mxu0 0.0
    %1308 = vmatprep.subr.mxu0 0.0
    %1309 = vmatpush1.msra.mxu0 0.0
    %1310 = vmatprep.subr.mxu0 0.0
    %1311 = vmatpush1.msra.mxu0 0.0
    %1312 = vmatprep.subr.mxu0 0.0
    %1313 = vmatpush1.msra.mxu0 0.0
    %1314 = vmatprep.subr.mxu0 0.0
    %1315 = vmatpush1.msra.mxu0 0.0
    %1316 = vmatprep.subr.mxu0 0.0
    %1317 = vmatpush1.msra.mxu0 0.0
    %1318 = vmatprep.subr.mxu0 0.0
    %1319 = vmatpush1.msra.mxu0 0.0
    %1320 = vmatprep.subr.mxu0 0.0
    %1321 = vmatpush1.msra.mxu0 0.0
    %1322 = vmatprep.mubr.f32.mxu0 0.0
    %1323 = vmatmul.mubr.f32.gmra.mrb[0].mxu0 %v1256
    %v1324 = vpop.f32.mrb[0].mxu0
    %v1325 = vadd.f32 0.0, %v1324
    %v1326 = vpop.f32.mrb[0].mxu0
    %1327 = vdwg.mxu0
    %v1329 = vsel %vm170, %v1249, 0
    %v1332 = vsel %vm170, %v1325, 0
    %1334 = vmatprep.subr.mxu0 0.0
    %1335 = vmatpush1.msra.mxu0 %v165
    %1336 = vmatprep.subr.mxu0 0.0
    %1337 = vmatpush1.msra.mxu0 0.0
    %1338 = vmatprep.subr.mxu0 0.0
    %1339 = vmatpush1.msra.mxu0 0.0
    %1340 = vmatprep.subr.mxu0 0.0
    %1341 = vmatpush1.msra.mxu0 0.0
    %1342 = vmatprep.subr.mxu0 0.0
    %1343 = vmatpush1.msra.mxu0 0.0
    %1344 = vmatprep.subr.mxu0 0.0
    %1345 = vmatpush1.msra.mxu0 0.0
    %1346 = vmatprep.subr.mxu0 0.0
    %1347 = vmatpush1.msra.mxu0 0.0
    %1348 = vmatprep.subr.mxu0 0.0
    %1349 = vmatpush1.msra.mxu0 0.0
    %1350 = vmatprep.subr.mxu0 0.0
    %1351 = vmatpush1.msra.mxu0 0.0
    %1352 = vmatprep.subr.mxu0 0.0
    %1353 = vmatpush1.msra.mxu0 0.0
    %1354 = vmatprep.subr.mxu0 0.0
    %1355 = vmatpush1.msra.mxu0 0.0
    %1356 = vmatprep.subr.mxu0 0.0
    %1357 = vmatpush1.msra.mxu0 0.0
    %1358 = vmatprep.subr.mxu0 0.0
    %1359 = vmatpush1.msra.mxu0 0.0
    %1360 = vmatprep.subr.mxu0 0.0
    %1361 = vmatpush1.msra.mxu0 0.0
    %1362 = vmatprep.subr.mxu0 0.0
    %1363 = vmatpush1.msra.mxu0 0.0
    %1364 = vmatprep.subr.mxu0 0.0
    %1365 = vmatpush1.msra.mxu0 0.0
    %1366 = vmatprep.subr.mxu0 0.0
    %1367 = vmatpush1.msra.mxu0 0.0
    %1368 = vmatprep.subr.mxu0 0.0
    %1369 = vmatpush1.msra.mxu0 0.0
    %1370 = vmatprep.subr.mxu0 0.0
    %1371 = vmatpush1.msra.mxu0 0.0
    %1372 = vmatprep.subr.mxu0 0.0
    %1373 = vmatpush1.msra.mxu0 0.0
    %1374 = vmatprep.subr.mxu0 0.0
    %1375 = vmatpush1.msra.mxu0 0.0
    %1376 = vmatprep.subr.mxu0 0.0
    %1377 = vmatpush1.msra.mxu0 0.0
    %1378 = vmatprep.subr.mxu0 0.0
    %1379 = vmatpush1.msra.mxu0 0.0
    %1380 = vmatprep.subr.mxu0 0.0
    %1381 = vmatpush1.msra.mxu0 0.0
    %1382 = vmatprep.subr.mxu0 0.0
    %1383 = vmatpush1.msra.mxu0 0.0
    %1384 = vmatprep.subr.mxu0 0.0
    %1385 = vmatpush1.msra.mxu0 0.0
    %1386 = vmatprep.subr.mxu0 0.0
    %1387 = vmatpush1.msra.mxu0 0.0
    %1388 = vmatprep.subr.mxu0 0.0
    %1389 = vmatpush1.msra.mxu0 0.0
    %1390 = vmatprep.subr.mxu0 0.0
    %1391 = vmatpush1.msra.mxu0 0.0
    %1392 = vmatprep.subr.mxu0 0.0
    %1393 = vmatpush1.msra.mxu0 0.0
    %1394 = vmatprep.subr.mxu0 0.0
    %1395 = vmatpush1.msra.mxu0 0.0
    %1396 = vmatprep.subr.mxu0 0.0
    %1397 = vmatpush1.msra.mxu0 0.0
    %1398 = vmatprep.mubr.f32.mxu0 0.0
    %1399 = vmatmul.mubr.f32.gmra.mrb[0].mxu0 %v1329
    %v1400 = vpop.f32.mrb[0].mxu0
    %v1401 = vadd.f32 0.0, %v1400
    %v1402 = vpop.f32.mrb[0].mxu0
    %1403 = vmatprep.mubr.f32.mxu0 0.0
    %1404 = vmatmul.mubr.f32.gmra.mrb[0].mxu0 %v1332
    %v1405 = vpop.f32.mrb[0].mxu0
    %v1406 = vadd.f32 0.0, %v1405
    %v1407 = vpop.f32.mrb[0].mxu0
    %1408 = vdwg.mxu0
    %v1409 = vadd.f32 %v988, %v1401
    %v1410 = vadd.f32 %v993, %v1406
    %1411 = vrot.lane.b32.xlu0 %v161, 104
    %v1412 = vpop.permute.xlu0 %1411
    %1413 = vrot.lane.b32.xlu0 %v153, 72
    %v1414 = vpop.permute.xlu0 %1413
    %v1415 = vsel %vm170, %v1412, 0
    %v1417 = vsel %vm170, %v1414, 0
    %1419 = vmatprep.subr.mxu0 0.0
    %1420 = vmatpush1.xpose.msra.mxu0 %v1417
    %1421 = vmatprep.subr.mxu0 0.0
    %1422 = vmatpush1.xpose.msra.mxu0 0.0
    %1423 = vmatprep.subr.mxu0 0.0
    %1424 = vmatpush1.xpose.msra.mxu0 0.0
    %1425 = vmatprep.subr.mxu0 0.0
    %1426 = vmatpush1.xpose.msra.mxu0 0.0
    %1427 = vmatprep.subr.mxu0 0.0
    %1428 = vmatpush1.xpose.msra.mxu0 0.0
    %1429 = vmatprep.subr.mxu0 0.0
    %1430 = vmatpush1.xpose.msra.mxu0 0.0
    %1431 = vmatprep.subr.mxu0 0.0
    %1432 = vmatpush1.xpose.msra.mxu0 0.0
    %1433 = vmatprep.subr.mxu0 0.0
    %1434 = vmatpush1.xpose.msra.mxu0 0.0
    %1435 = vmatprep.subr.mxu0 0.0
    %1436 = vmatpush1.xpose.msra.mxu0 0.0
    %1437 = vmatprep.subr.mxu0 0.0
    %1438 = vmatpush1.xpose.msra.mxu0 0.0
    %1439 = vmatprep.subr.mxu0 0.0
    %1440 = vmatpush1.xpose.msra.mxu0 0.0
    %1441 = vmatprep.subr.mxu0 0.0
    %1442 = vmatpush1.xpose.msra.mxu0 0.0
    %1443 = vmatprep.subr.mxu0 0.0
    %1444 = vmatpush1.xpose.msra.mxu0 0.0
    %1445 = vmatprep.subr.mxu0 0.0
    %1446 = vmatpush1.xpose.msra.mxu0 0.0
    %1447 = vmatprep.subr.mxu0 0.0
    %1448 = vmatpush1.xpose.msra.mxu0 0.0
    %1449 = vmatprep.subr.mxu0 0.0
    %1450 = vmatpush1.xpose.msra.mxu0 0.0
    %1451 = vmatprep.subr.mxu0 0.0
    %1452 = vmatpush1.xpose.msra.mxu0 0.0
    %1453 = vmatprep.subr.mxu0 0.0
    %1454 = vmatpush1.xpose.msra.mxu0 0.0
    %1455 = vmatprep.subr.mxu0 0.0
    %1456 = vmatpush1.xpose.msra.mxu0 0.0
    %1457 = vmatprep.subr.mxu0 0.0
    %1458 = vmatpush1.xpose.msra.mxu0 0.0
    %1459 = vmatprep.subr.mxu0 0.0
    %1460 = vmatpush1.xpose.msra.mxu0 0.0
    %1461 = vmatprep.subr.mxu0 0.0
    %1462 = vmatpush1.xpose.msra.mxu0 0.0
    %1463 = vmatprep.subr.mxu0 0.0
    %1464 = vmatpush1.xpose.msra.mxu0 0.0
    %1465 = vmatprep.subr.mxu0 0.0
    %1466 = vmatpush1.xpose.msra.mxu0 0.0
    %1467 = vmatprep.subr.mxu0 0.0
    %1468 = vmatpush1.xpose.msra.mxu0 0.0
    %1469 = vmatprep.subr.mxu0 0.0
    %1470 = vmatpush1.xpose.msra.mxu0 0.0
    %1471 = vmatprep.subr.mxu0 0.0
    %1472 = vmatpush1.xpose.msra.mxu0 0.0
    %1473 = vmatprep.subr.mxu0 0.0
    %1474 = vmatpush1.xpose.msra.mxu0 0.0
    %1475 = vmatprep.subr.mxu0 0.0
    %1476 = vmatpush1.xpose.msra.mxu0 0.0
    %1477 = vmatprep.subr.mxu0 0.0
    %1478 = vmatpush1.xpose.msra.mxu0 0.0
    %1479 = vmatprep.subr.mxu0 0.0
    %1480 = vmatpush1.xpose.msra.mxu0 0.0
    %1481 = vmatprep.subr.mxu0 0.0
    %1482 = vmatpush1.xpose.msra.mxu0 0.0
    %1483 = vmatprep.mubr.f32.mxu0 0.0
    %1484 = vmatmul.mubr.f32.gmra.mrb[0].mxu0 %v1415
    %v1485 = vpop.f32.mrb[0].mxu0
    %v1486 = vadd.f32 0.0, %v1485
    %v1487 = vpop.f32.mrb[0].mxu0
    %1488 = vdwg.mxu0
    %1489 = vrot.lane.b32.xlu0 %v162, 104
    %v1490 = vpop.permute.xlu0 %1489
    %1491 = vrot.lane.b32.xlu0 %v158, 72
    %v1492 = vpop.permute.xlu0 %1491
    %v1493 = vsel %vm170, %v1490, 0
    %v1495 = vsel %vm170, %v1492, 0
    %1497 = vmatprep.subr.mxu0 0.0
    %1498 = vmatpush1.xpose.msra.mxu0 %v1495
    %1499 = vmatprep.subr.mxu0 0.0
    %1500 = vmatpush1.xpose.msra.mxu0 0.0
    %1501 = vmatprep.subr.mxu0 0.0
    %1502 = vmatpush1.xpose.msra.mxu0 0.0
    %1503 = vmatprep.subr.mxu0 0.0
    %1504 = vmatpush1.xpose.msra.mxu0 0.0
    %1505 = vmatprep.subr.mxu0 0.0
    %1506 = vmatpush1.xpose.msra.mxu0 0.0
    %1507 = vmatprep.subr.mxu0 0.0
    %1508 = vmatpush1.xpose.msra.mxu0 0.0
    %1509 = vmatprep.subr.mxu0 0.0
    %1510 = vmatpush1.xpose.msra.mxu0 0.0
    %1511 = vmatprep.subr.mxu0 0.0
    %1512 = vmatpush1.xpose.msra.mxu0 0.0
    %1513 = vmatprep.subr.mxu0 0.0
    %1514 = vmatpush1.xpose.msra.mxu0 0.0
    %1515 = vmatprep.subr.mxu0 0.0
    %1516 = vmatpush1.xpose.msra.mxu0 0.0
    %1517 = vmatprep.subr.mxu0 0.0
    %1518 = vmatpush1.xpose.msra.mxu0 0.0
    %1519 = vmatprep.subr.mxu0 0.0
    %1520 = vmatpush1.xpose.msra.mxu0 0.0
    %1521 = vmatprep.subr.mxu0 0.0
    %1522 = vmatpush1.xpose.msra.mxu0 0.0
    %1523 = vmatprep.subr.mxu0 0.0
    %1524 = vmatpush1.xpose.msra.mxu0 0.0
    %1525 = vmatprep.subr.mxu0 0.0
    %1526 = vmatpush1.xpose.msra.mxu0 0.0
    %1527 = vmatprep.subr.mxu0 0.0
    %1528 = vmatpush1.xpose.msra.mxu0 0.0
    %1529 = vmatprep.subr.mxu0 0.0
    %1530 = vmatpush1.xpose.msra.mxu0 0.0
    %1531 = vmatprep.subr.mxu0 0.0
    %1532 = vmatpush1.xpose.msra.mxu0 0.0
    %1533 = vmatprep.subr.mxu0 0.0
    %1534 = vmatpush1.xpose.msra.mxu0 0.0
    %1535 = vmatprep.subr.mxu0 0.0
    %1536 = vmatpush1.xpose.msra.mxu0 0.0
    %1537 = vmatprep.subr.mxu0 0.0
    %1538 = vmatpush1.xpose.msra.mxu0 0.0
    %1539 = vmatprep.subr.mxu0 0.0
    %1540 = vmatpush1.xpose.msra.mxu0 0.0
    %1541 = vmatprep.subr.mxu0 0.0
    %1542 = vmatpush1.xpose.msra.mxu0 0.0
    %1543 = vmatprep.subr.mxu0 0.0
    %1544 = vmatpush1.xpose.msra.mxu0 0.0
    %1545 = vmatprep.subr.mxu0 0.0
    %1546 = vmatpush1.xpose.msra.mxu0 0.0
    %1547 = vmatprep.subr.mxu0 0.0
    %1548 = vmatpush1.xpose.msra.mxu0 0.0
    %1549 = vmatprep.subr.mxu0 0.0
    %1550 = vmatpush1.xpose.msra.mxu0 0.0
    %1551 = vmatprep.subr.mxu0 0.0
    %1552 = vmatpush1.xpose.msra.mxu0 0.0
    %1553 = vmatprep.subr.mxu0 0.0
    %1554 = vmatpush1.xpose.msra.mxu0 0.0
    %1555 = vmatprep.subr.mxu0 0.0
    %1556 = vmatpush1.xpose.msra.mxu0 0.0
    %1557 = vmatprep.subr.mxu0 0.0
    %1558 = vmatpush1.xpose.msra.mxu0 0.0
    %1559 = vmatprep.subr.mxu0 0.0
    %1560 = vmatpush1.xpose.msra.mxu0 0.0
    %1561 = vmatprep.mubr.f32.mxu0 0.0
    %1562 = vmatmul.mubr.f32.gmra.mrb[0].mxu0 %v1493
    %v1563 = vpop.f32.mrb[0].mxu0
    %v1564 = vadd.f32 0.0, %v1563
    %v1565 = vpop.f32.mrb[0].mxu0
    %1566 = vdwg.mxu0
    %v1567 = vsel %vm324, -1e+09, %v1486
    %v1568 = vsel %vm325, -1e+09, %v1564
    %v1569 = vsel %vm170, %v1567, -inf
    %1570 = vmax.xlane.f32.xlu0 %v1569
    %v1571 = vpop.xlane.xlu0 %1570
    %v1572 = vsel %vm170, %v1568, -inf
    %1573 = vmax.xlane.f32.xlu0 %v1572
    %v1574 = vpop.xlane.xlu0 %1573
    %v1575 = vsub.f32 %v1567, %v1571
    %v1576 = vsub.f32 %v1568, %v1574
    %v1577 = vmul.f32 %v1575, 1.442695
    %v1578 = vpow.pop %v1577
    %v1579 = vmul.f32 %v1576, 1.442695
    %v1580 = vpow.pop %v1579
    %v1581 = vsel %vm170, %v1578, 0.0
    %1582 = vadd.xlane.f32.xlu0 %v1581
    %v1583 = vpop.xlane.xlu0 %1582
    %v1584 = vsel %vm170, %v1580, 0.0
    %1585 = vadd.xlane.f32.xlu0 %v1584
    %v1586 = vpop.xlane.xlu0 %1585
    %v1587 = vrcp.pop %v1583
    %v1588 = vrcp.pop %v1586
    %v1589 = vmul.f32 %v1578, %v1587
    %v1590 = vmul.f32 %v1580, %v1588
    %1591 = vrot.lane.b32.xlu0 %v153, 40
    %v1592 = vpop.permute.xlu0 %1591
    %v1595 = vsel %vm170, %v1589, 0
    %1597 = vmatprep.subr.mxu0 0.0
    %1598 = vmatpush1.msra.mxu0 %v1592
    %1599 = vmatprep.subr.mxu0 0.0
    %1600 = vmatpush1.msra.mxu0 0.0
    %1601 = vmatprep.subr.mxu0 0.0
    %1602 = vmatpush1.msra.mxu0 0.0
    %1603 = vmatprep.subr.mxu0 0.0
    %1604 = vmatpush1.msra.mxu0 0.0
    %1605 = vmatprep.subr.mxu0 0.0
    %1606 = vmatpush1.msra.mxu0 0.0
    %1607 = vmatprep.subr.mxu0 0.0
    %1608 = vmatpush1.msra.mxu0 0.0
    %1609 = vmatprep.subr.mxu0 0.0
    %1610 = vmatpush1.msra.mxu0 0.0
    %1611 = vmatprep.subr.mxu0 0.0
    %1612 = vmatpush1.msra.mxu0 0.0
    %1613 = vmatprep.subr.mxu0 0.0
    %1614 = vmatpush1.msra.mxu0 0.0
    %1615 = vmatprep.subr.mxu0 0.0
    %1616 = vmatpush1.msra.mxu0 0.0
    %1617 = vmatprep.subr.mxu0 0.0
    %1618 = vmatpush1.msra.mxu0 0.0
    %1619 = vmatprep.subr.mxu0 0.0
    %1620 = vmatpush1.msra.mxu0 0.0
    %1621 = vmatprep.subr.mxu0 0.0
    %1622 = vmatpush1.msra.mxu0 0.0
    %1623 = vmatprep.subr.mxu0 0.0
    %1624 = vmatpush1.msra.mxu0 0.0
    %1625 = vmatprep.subr.mxu0 0.0
    %1626 = vmatpush1.msra.mxu0 0.0
    %1627 = vmatprep.subr.mxu0 0.0
    %1628 = vmatpush1.msra.mxu0 0.0
    %1629 = vmatprep.subr.mxu0 0.0
    %1630 = vmatpush1.msra.mxu0 0.0
    %1631 = vmatprep.subr.mxu0 0.0
    %1632 = vmatpush1.msra.mxu0 0.0
    %1633 = vmatprep.subr.mxu0 0.0
    %1634 = vmatpush1.msra.mxu0 0.0
    %1635 = vmatprep.subr.mxu0 0.0
    %1636 = vmatpush1.msra.mxu0 0.0
    %1637 = vmatprep.subr.mxu0 0.0
    %1638 = vmatpush1.msra.mxu0 0.0
    %1639 = vmatprep.subr.mxu0 0.0
    %1640 = vmatpush1.msra.mxu0 0.0
    %1641 = vmatprep.subr.mxu0 0.0
    %1642 = vmatpush1.msra.mxu0 0.0
    %1643 = vmatprep.subr.mxu0 0.0
    %1644 = vmatpush1.msra.mxu0 0.0
    %1645 = vmatprep.subr.mxu0 0.0
    %1646 = vmatpush1.msra.mxu0 0.0
    %1647 = vmatprep.subr.mxu0 0.0
    %1648 = vmatpush1.msra.mxu0 0.0
    %1649 = vmatprep.subr.mxu0 0.0
    %1650 = vmatpush1.msra.mxu0 0.0
    %1651 = vmatprep.subr.mxu0 0.0
    %1652 = vmatpush1.msra.mxu0 0.0
    %1653 = vmatprep.subr.mxu0 0.0
    %1654 = vmatpush1.msra.mxu0 0.0
    %1655 = vmatprep.subr.mxu0 0.0
    %1656 = vmatpush1.msra.mxu0 0.0
    %1657 = vmatprep.subr.mxu0 0.0
    %1658 = vmatpush1.msra.mxu0 0.0
    %1659 = vmatprep.subr.mxu0 0.0
    %1660 = vmatpush1.msra.mxu0 0.0
    %1661 = vmatprep.mubr.f32.mxu0 0.0
    %1662 = vmatmul.mubr.f32.gmra.mrb[0].mxu0 %v1595
    %v1663 = vpop.f32.mrb[0].mxu0
    %v1664 = vadd.f32 0.0, %v1663
    %v1665 = vpop.f32.mrb[0].mxu0
    %1666 = vdwg.mxu0
    %1667 = vrot.lane.b32.xlu0 %v158, 40
    %v1668 = vpop.permute.xlu0 %1667
    %v1671 = vsel %vm170, %v1590, 0
    %1673 = vmatprep.subr.mxu0 0.0
    %1674 = vmatpush1.msra.mxu0 %v1668
    %1675 = vmatprep.subr.mxu0 0.0
    %1676 = vmatpush1.msra.mxu0 0.0
    %1677 = vmatprep.subr.mxu0 0.0
    %1678 = vmatpush1.msra.mxu0 0.0
    %1679 = vmatprep.subr.mxu0 0.0
    %1680 = vmatpush1.msra.mxu0 0.0
    %1681 = vmatprep.subr.mxu0 0.0
    %1682 = vmatpush1.msra.mxu0 0.0
    %1683 = vmatprep.subr.mxu0 0.0
    %1684 = vmatpush1.msra.mxu0 0.0
    %1685 = vmatprep.subr.mxu0 0.0
    %1686 = vmatpush1.msra.mxu0 0.0
    %1687 = vmatprep.subr.mxu0 0.0
    %1688 = vmatpush1.msra.mxu0 0.0
    %1689 = vmatprep.subr.mxu0 0.0
    %1690 = vmatpush1.msra.mxu0 0.0
    %1691 = vmatprep.subr.mxu0 0.0
    %1692 = vmatpush1.msra.mxu0 0.0
    %1693 = vmatprep.subr.mxu0 0.0
    %1694 = vmatpush1.msra.mxu0 0.0
    %1695 = vmatprep.subr.mxu0 0.0
    %1696 = vmatpush1.msra.mxu0 0.0
    %1697 = vmatprep.subr.mxu0 0.0
    %1698 = vmatpush1.msra.mxu0 0.0
    %1699 = vmatprep.subr.mxu0 0.0
    %1700 = vmatpush1.msra.mxu0 0.0
    %1701 = vmatprep.subr.mxu0 0.0
    %1702 = vmatpush1.msra.mxu0 0.0
    %1703 = vmatprep.subr.mxu0 0.0
    %1704 = vmatpush1.msra.mxu0 0.0
    %1705 = vmatprep.subr.mxu0 0.0
    %1706 = vmatpush1.msra.mxu0 0.0
    %1707 = vmatprep.subr.mxu0 0.0
    %1708 = vmatpush1.msra.mxu0 0.0
    %1709 = vmatprep.subr.mxu0 0.0
    %1710 = vmatpush1.msra.mxu0 0.0
    %1711 = vmatprep.subr.mxu0 0.0
    %1712 = vmatpush1.msra.mxu0 0.0
    %1713 = vmatprep.subr.mxu0 0.0
    %1714 = vmatpush1.msra.mxu0 0.0
    %1715 = vmatprep.subr.mxu0 0.0
    %1716 = vmatpush1.msra.mxu0 0.0
    %1717 = vmatprep.subr.mxu0 0.0
    %1718 = vmatpush1.msra.mxu0 0.0
    %1719 = vmatprep.subr.mxu0 0.0
    %1720 = vmatpush1.msra.mxu0 0.0
    %1721 = vmatprep.subr.mxu0 0.0
    %1722 = vmatpush1.msra.mxu0 0.0
    %1723 = vmatprep.subr.mxu0 0.0
    %1724 = vmatpush1.msra.mxu0 0.0
    %1725 = vmatprep.subr.mxu0 0.0
    %1726 = vmatpush1.msra.mxu0 0.0
    %1727 = vmatprep.subr.mxu0 0.0
    %1728 = vmatpush1.msra.mxu0 0.0
    %1729 = vmatprep.subr.mxu0 0.0
    %1730 = vmatpush1.msra.mxu0 0.0
    %1731 = vmatprep.subr.mxu0 0.0
    %1732 = vmatpush1.msra.mxu0 0.0
    %1733 = vmatprep.subr.mxu0 0.0
    %1734 = vmatpush1.msra.mxu0 0.0
    %1735 = vmatprep.subr.mxu0 0.0
    %1736 = vmatpush1.msra.mxu0 0.0
    %1737 = vmatprep.mubr.f32.mxu0 0.0
    %1738 = vmatmul.mubr.f32.gmra.mrb[0].mxu0 %v1671
    %v1739 = vpop.f32.mrb[0].mxu0
    %v1740 = vadd.f32 0.0, %v1739
    %v1741 = vpop.f32.mrb[0].mxu0
    %1742 = vdwg.mxu0
    %v1744 = vsel %vm170, %v1664, 0
    %v1747 = vsel %vm170, %v1740, 0
    %1749 = vmatprep.subr.mxu0 0.0
    %1750 = vmatpush1.msra.mxu0 %v166
    %1751 = vmatprep.subr.mxu0 0.0
    %1752 = vmatpush1.msra.mxu0 0.0
    %1753 = vmatprep.subr.mxu0 0.0
    %1754 = vmatpush1.msra.mxu0 0.0
    %1755 = vmatprep.subr.mxu0 0.0
    %1756 = vmatpush1.msra.mxu0 0.0
    %1757 = vmatprep.subr.mxu0 0.0
    %1758 = vmatpush1.msra.mxu0 0.0
    %1759 = vmatprep.subr.mxu0 0.0
    %1760 = vmatpush1.msra.mxu0 0.0
    %1761 = vmatprep.subr.mxu0 0.0
    %1762 = vmatpush1.msra.mxu0 0.0
    %1763 = vmatprep.subr.mxu0 0.0
    %1764 = vmatpush1.msra.mxu0 0.0
    %1765 = vmatprep.subr.mxu0 0.0
    %1766 = vmatpush1.msra.mxu0 0.0
    %1767 = vmatprep.subr.mxu0 0.0
    %1768 = vmatpush1.msra.mxu0 0.0
    %1769 = vmatprep.subr.mxu0 0.0
    %1770 = vmatpush1.msra.mxu0 0.0
    %1771 = vmatprep.subr.mxu0 0.0
    %1772 = vmatpush1.msra.mxu0 0.0
    %1773 = vmatprep.subr.mxu0 0.0
    %1774 = vmatpush1.msra.mxu0 0.0
    %1775 = vmatprep.subr.mxu0 0.0
    %1776 = vmatpush1.msra.mxu0 0.0
    %1777 = vmatprep.subr.mxu0 0.0
    %1778 = vmatpush1.msra.mxu0 0.0
    %1779 = vmatprep.subr.mxu0 0.0
    %1780 = vmatpush1.msra.mxu0 0.0
    %1781 = vmatprep.subr.mxu0 0.0
    %1782 = vmatpush1.msra.mxu0 0.0
    %1783 = vmatprep.subr.mxu0 0.0
    %1784 = vmatpush1.msra.mxu0 0.0
    %1785 = vmatprep.subr.mxu0 0.0
    %1786 = vmatpush1.msra.mxu0 0.0
    %1787 = vmatprep.subr.mxu0 0.0
    %1788 = vmatpush1.msra.mxu0 0.0
    %1789 = vmatprep.subr.mxu0 0.0
    %1790 = vmatpush1.msra.mxu0 0.0
    %1791 = vmatprep.subr.mxu0 0.0
    %1792 = vmatpush1.msra.mxu0 0.0
    %1793 = vmatprep.subr.mxu0 0.0
    %1794 = vmatpush1.msra.mxu0 0.0
    %1795 = vmatprep.subr.mxu0 0.0
    %1796 = vmatpush1.msra.mxu0 0.0
    %1797 = vmatprep.subr.mxu0 0.0
    %1798 = vmatpush1.msra.mxu0 0.0
    %1799 = vmatprep.subr.mxu0 0.0
    %1800 = vmatpush1.msra.mxu0 0.0
    %1801 = vmatprep.subr.mxu0 0.0
    %1802 = vmatpush1.msra.mxu0 0.0
    %1803 = vmatprep.subr.mxu0 0.0
    %1804 = vmatpush1.msra.mxu0 0.0
    %1805 = vmatprep.subr.mxu0 0.0
    %1806 = vmatpush1.msra.mxu0 0.0
    %1807 = vmatprep.subr.mxu0 0.0
    %1808 = vmatpush1.msra.mxu0 0.0
    %1809 = vmatprep.subr.mxu0 0.0
    %1810 = vmatpush1.msra.mxu0 0.0
    %1811 = vmatprep.subr.mxu0 0.0
    %1812 = vmatpush1.msra.mxu0 0.0
    %1813 = vmatprep.mubr.f32.mxu0 0.0
    %1814 = vmatmul.mubr.f32.gmra.mrb[0].mxu0 %v1744
    %v1815 = vpop.f32.mrb[0].mxu0
    %v1816 = vadd.f32 0.0, %v1815
    %v1817 = vpop.f32.mrb[0].mxu0
    %1818 = vmatprep.mubr.f32.mxu0 0.0
    %1819 = vmatmul.mubr.f32.gmra.mrb[0].mxu0 %v1747
    %v1820 = vpop.f32.mrb[0].mxu0
    %v1821 = vadd.f32 0.0, %v1820
    %v1822 = vpop.f32.mrb[0].mxu0
    %1823 = vdwg.mxu0
    %v1824 = vadd.f32 %v1409, %v1816
    %v1825 = vadd.f32 %v1410, %v1821
    %v1826 = vld [vmem:[%s5] sm:$0x1]
    %v1828 = vlaneseq
    %v1829 = vshrl.u32 %v1828, 7
    %v1830 = vsub.s32 0, %v1829
    %v1831 = vrot.slane %v1826, %v1830
    %v1833 = vadd.f32 %v1824, %v1831
    %v1834 = vadd.f32 %v1825, %v1831
    %v1835 = vld [vmem:[%s6] sm:$0xff]
    %v1836 = vld [vmem:[%s6 + $0x8] sm:$0xff]
    %v1837 = vld [vmem:[%s6 + $0x10] sm:$0xff]
    %v1838 = vld [vmem:[%s6 + $0x18] sm:$0xff]
    %v1839 = vld [vmem:[%s7] sm:$0x1]
    %v1841 = vlaneseq
    %v1842 = vshrl.u32 %v1841, 7
    %v1843 = vsub.s32 0, %v1842
    %v1844 = vrot.slane %v1839, %v1843
    %v1847 = vsel %vm79, %v1833, 0
    %v1850 = vsel %vm79, %v1834, 0
    %1852 = vmatprep.subr.mxu0 0.0
    %1853 = vmatpush1.msra.mxu0 %v1835
    %1854 = vmatprep.subr.mxu0 0.0
    %1855 = vmatpush1.msra.mxu0 %v1836
    %1856 = vmatprep.subr.mxu0 0.0
    %1857 = vmatpush1.msra.mxu0 %v1837
    %1858 = vmatprep.subr.mxu0 0.0
    %1859 = vmatpush1.msra.mxu0 %v1838
    %1860 = vmatprep.subr.mxu0 0.0
    %1861 = vmatpush1.msra.mxu0 0.0
    %1862 = vmatprep.subr.mxu0 0.0
    %1863 = vmatpush1.msra.mxu0 0.0
    %1864 = vmatprep.subr.mxu0 0.0
    %1865 = vmatpush1.msra.mxu0 0.0
    %1866 = vmatprep.subr.mxu0 0.0
    %1867 = vmatpush1.msra.mxu0 0.0
    %1868 = vmatprep.subr.mxu0 0.0
    %1869 = vmatpush1.msra.mxu0 0.0
    %1870 = vmatprep.subr.mxu0 0.0
    %1871 = vmatpush1.msra.mxu0 0.0
    %1872 = vmatprep.subr.mxu0 0.0
    %1873 = vmatpush1.msra.mxu0 0.0
    %1874 = vmatprep.subr.mxu0 0.0
    %1875 = vmatpush1.msra.mxu0 0.0
    %1876 = vmatprep.subr.mxu0 0.0
    %1877 = vmatpush1.msra.mxu0 0.0
    %1878 = vmatprep.subr.mxu0 0.0
    %1879 = vmatpush1.msra.mxu0 0.0
    %1880 = vmatprep.subr.mxu0 0.0
    %1881 = vmatpush1.msra.mxu0 0.0
    %1882 = vmatprep.subr.mxu0 0.0
    %1883 = vmatpush1.msra.mxu0 0.0
    %1884 = vmatprep.subr.mxu0 0.0
    %1885 = vmatpush1.msra.mxu0 0.0
    %1886 = vmatprep.subr.mxu0 0.0
    %1887 = vmatpush1.msra.mxu0 0.0
    %1888 = vmatprep.subr.mxu0 0.0
    %1889 = vmatpush1.msra.mxu0 0.0
    %1890 = vmatprep.subr.mxu0 0.0
    %1891 = vmatpush1.msra.mxu0 0.0
    %1892 = vmatprep.subr.mxu0 0.0
    %1893 = vmatpush1.msra.mxu0 0.0
    %1894 = vmatprep.subr.mxu0 0.0
    %1895 = vmatpush1.msra.mxu0 0.0
    %1896 = vmatprep.subr.mxu0 0.0
    %1897 = vmatpush1.msra.mxu0 0.0
    %1898 = vmatprep.subr.mxu0 0.0
    %1899 = vmatpush1.msra.mxu0 0.0
    %1900 = vmatprep.subr.mxu0 0.0
    %1901 = vmatpush1.msra.mxu0 0.0
    %1902 = vmatprep.subr.mxu0 0.0
    %1903 = vmatpush1.msra.mxu0 0.0
    %1904 = vmatprep.subr.mxu0 0.0
    %1905 = vmatpush1.msra.mxu0 0.0
    %1906 = vmatprep.subr.mxu0 0.0
    %1907 = vmatpush1.msra.mxu0 0.0
    %1908 = vmatprep.subr.mxu0 0.0
    %1909 = vmatpush1.msra.mxu0 0.0
    %1910 = vmatprep.subr.mxu0 0.0
    %1911 = vmatpush1.msra.mxu0 0.0
    %1912 = vmatprep.subr.mxu0 0.0
    %1913 = vmatpush1.msra.mxu0 0.0
    %1914 = vmatprep.subr.mxu0 0.0
    %1915 = vmatpush1.msra.mxu0 0.0
    %1916 = vmatprep.mubr.f32.mxu0 0.0
    %1917 = vmatmul.mubr.f32.gmra.mrb[0].mxu0 %v1847
    %v1918 = vpop.f32.mrb[0].mxu0
    %v1919 = vadd.f32 %v1844, %v1918
    %v1920 = vpop.f32.mrb[0].mxu0
    %1921 = vmatprep.mubr.f32.mxu0 0.0
    %1922 = vmatmul.mubr.f32.gmra.mrb[0].mxu0 %v1850
    %v1923 = vpop.f32.mrb[0].mxu0
    %v1924 = vadd.f32 %v1844, %v1923
    %v1925 = vpop.f32.mrb[0].mxu0
    %1926 = vdwg.mxu0
    %v1927 = vmax.f32 %v1919, 0.0
    %v1928 = vmax.f32 %v1924, 0.0
    %v1929 = vld [vmem:[%s8] sm:$0xff]
    %v1930 = vld [vmem:[%s8 + $0x8] sm:$0xff]
    %v1931 = vld [vmem:[%s8 + $0x10] sm:$0xff]
    %v1932 = vld [vmem:[%s8 + $0x18] sm:$0xff]
    %v1933 = vld [vmem:[%s8 + $0x20] sm:$0xff]
    %v1934 = vld [vmem:[%s8 + $0x28] sm:$0xff]
    %v1935 = vld [vmem:[%s8 + $0x30] sm:$0xff]
    %v1936 = vld [vmem:[%s8 + $0x38] sm:$0xff]
    %v1937 = vld [vmem:[%s9] sm:$0x1]
    %v1939 = vlaneseq
    %v1940 = vshrl.u32 %v1939, 7
    %v1941 = vsub.s32 0, %v1940
    %v1942 = vrot.slane %v1937, %v1941
    %vm1944 = vcmask 523264
    %v1946 = vsel %vm1944, %v1927, 0
    %v1949 = vsel %vm1944, %v1928, 0
    %1951 = vmatprep.subr.mxu0 0.0
    %1952 = vmatpush1.msra.mxu0 %v1929
    %1953 = vmatprep.subr.mxu0 0.0
    %1954 = vmatpush1.msra.mxu0 %v1930
    %1955 = vmatprep.subr.mxu0 0.0
    %1956 = vmatpush1.msra.mxu0 %v1931
    %1957 = vmatprep.subr.mxu0 0.0
    %1958 = vmatpush1.msra.mxu0 %v1932
    %1959 = vmatprep.subr.mxu0 0.0
    %1960 = vmatpush1.msra.mxu0 %v1933
    %1961 = vmatprep.subr.mxu0 0.0
    %1962 = vmatpush1.msra.mxu0 %v1934
    %1963 = vmatprep.subr.mxu0 0.0
    %1964 = vmatpush1.msra.mxu0 %v1935
    %1965 = vmatprep.subr.mxu0 0.0
    %1966 = vmatpush1.msra.mxu0 %v1936
    %1967 = vmatprep.subr.mxu0 0.0
    %1968 = vmatpush1.msra.mxu0 0.0
    %1969 = vmatprep.subr.mxu0 0.0
    %1970 = vmatpush1.msra.mxu0 0.0
    %1971 = vmatprep.subr.mxu0 0.0
    %1972 = vmatpush1.msra.mxu0 0.0
    %1973 = vmatprep.subr.mxu0 0.0
    %1974 = vmatpush1.msra.mxu0 0.0
    %1975 = vmatprep.subr.mxu0 0.0
    %1976 = vmatpush1.msra.mxu0 0.0
    %1977 = vmatprep.subr.mxu0 0.0
    %1978 = vmatpush1.msra.mxu0 0.0
    %1979 = vmatprep.subr.mxu0 0.0
    %1980 = vmatpush1.msra.mxu0 0.0
    %1981 = vmatprep.subr.mxu0 0.0
    %1982 = vmatpush1.msra.mxu0 0.0
    %1983 = vmatprep.subr.mxu0 0.0
    %1984 = vmatpush1.msra.mxu0 0.0
    %1985 = vmatprep.subr.mxu0 0.0
    %1986 = vmatpush1.msra.mxu0 0.0
    %1987 = vmatprep.subr.mxu0 0.0
    %1988 = vmatpush1.msra.mxu0 0.0
    %1989 = vmatprep.subr.mxu0 0.0
    %1990 = vmatpush1.msra.mxu0 0.0
    %1991 = vmatprep.subr.mxu0 0.0
    %1992 = vmatpush1.msra.mxu0 0.0
    %1993 = vmatprep.subr.mxu0 0.0
    %1994 = vmatpush1.msra.mxu0 0.0
    %1995 = vmatprep.subr.mxu0 0.0
    %1996 = vmatpush1.msra.mxu0 0.0
    %1997 = vmatprep.subr.mxu0 0.0
    %1998 = vmatpush1.msra.mxu0 0.0
    %1999 = vmatprep.subr.mxu0 0.0
    %2000 = vmatpush1.msra.mxu0 0.0
    %2001 = vmatprep.subr.mxu0 0.0
    %2002 = vmatpush1.msra.mxu0 0.0
    %2003 = vmatprep.subr.mxu0 0.0
    %2004 = vmatpush1.msra.mxu0 0.0
    %2005 = vmatprep.subr.mxu0 0.0
    %2006 = vmatpush1.msra.mxu0 0.0
    %2007 = vmatprep.subr.mxu0 0.0
    %2008 = vmatpush1.msra.mxu0 0.0
    %2009 = vmatprep.subr.mxu0 0.0
    %2010 = vmatpush1.msra.mxu0 0.0
    %2011 = vmatprep.subr.mxu0 0.0
    %2012 = vmatpush1.msra.mxu0 0.0
    %2013 = vmatprep.subr.mxu0 0.0
    %2014 = vmatpush1.msra.mxu0 0.0
    %2015 = vmatprep.mubr.f32.mxu0 0.0
    %2016 = vmatmul.mubr.f32.gmra.mrb[0].mxu0 %v1946
    %v2017 = vpop.f32.mrb[0].mxu0
    %v2018 = vadd.f32 %v1942, %v2017
    %v2019 = vpop.f32.mrb[0].mxu0
    %2020 = vmatprep.mubr.f32.mxu0 0.0
    %2021 = vmatmul.mubr.f32.gmra.mrb[0].mxu0 %v1949
    %v2022 = vpop.f32.mrb[0].mxu0
    %v2023 = vadd.f32 %v1942, %v2022
    %v2024 = vpop.f32.mrb[0].mxu0
    %2025 = vdwg.mxu0
    %2026 = vst.msk [vmem:[#allocation7] sm:$0xff] %vm79, %v2018
    %2027 = vst.msk [vmem:[#allocation7 + $0x8] sm:$0xff] %vm79, %v2023
    // Predicated region
    $region50: #{tpu_custom_call.1} parent=1 // pred_check
      _
    $region51: #{tpu_custom_call.1} parent=1 // pred_check_branch
      %2029 = sbr.rel (0) target = $region53
    $region52: #{tpu_custom_call.1} parent=1 // pred_region
      %s2031 = ssub.s32 256, 256
      %2032 = vsyncadd [#allocation4], %s2031
      %s2033 = sshll.u32 [#allocation7], 4
      %s2034 = int_to_ptr.vmem [resolvable:$true] %s2033
      %2039 = dma.vmem_to_hbm [thread:$0]  %s2034, 256, %s10, [#allocation4], 128, 128, 8
    $region53: #{tpu_custom_call.1} parent=1 // pred_fallthru
      _
    // Predicated region
    $region54: #{tpu_custom_call.1} parent=1 // pred_check
      _
    $region55: #{tpu_custom_call.1} parent=1 // pred_check_branch
      %2041 = sbr.rel (0) target = $region57
    $region56: #{tpu_custom_call.1} parent=1 // pred_region
      %2042 = dma.done [#allocation4], 256
    $region57: #{tpu_custom_call.1} parent=1 // pred_fallthru
      _
    %2043 = vsyncpa [#allocation3], 1
    %2044 = vsyncpa [#allocation6], 1
    %2045 = vsyncpa [#allocation4], 1

</llo_original>
